<compile_context>
chip_gen: v5e
topology: v5e:2x2
jax: 0.10.0
libtpu: 0.0.40
codegen_flags: <defaults>
</compile_context>

<pallas_src>
import functools

import jax
import jax.numpy as jnp
import numpy as np
from jax.experimental import pallas as pl
from jax.experimental.pallas import tpu as pltpu


def _conv_out(n, k=3, stride=2, pad=1):
    return (n + 2 * pad - k) // stride + 1


# ----------------------------------------------------------------------------
# The single fused Pallas kernel: 5 matmuls, all intermediates VMEM-resident.
# ----------------------------------------------------------------------------
def _fused_kernel(x_ref, m1_ref, b1_ref, m2_ref, b2_ref, fcw_ref, fcb_ref,
                  w1c_ref, b1c_ref, w2c_ref, b2c_ref, o_ref):
    f32 = jnp.float32
    # conv1 (im2col folded into m1) + bias + ReLU          (B, P1*C1)
    h1 = jnp.maximum(
        jnp.dot(x_ref[...], m1_ref[...], preferred_element_type=f32) + b1_ref[...], 0.0)
    # conv2 (im2col folded into m2) + bias + ReLU          (B, P2*C2)
    h2 = jnp.maximum(
        jnp.dot(h1, m2_ref[...], preferred_element_type=f32) + b2_ref[...], 0.0)
    # fc + ReLU (latent)                                   (B, F)
    z = jnp.maximum(
        jnp.dot(h2, fcw_ref[...], preferred_element_type=f32) + fcb_ref[...], 0.0)
    # packed heads: layer1 (policy|value hidden) + ReLU    (B, 64)
    hh = jnp.maximum(
        jnp.dot(z, w1c_ref[...], preferred_element_type=f32) + b1c_ref[...], 0.0)
    # packed heads: block-diagonal layer2, lane-dense slab (B, 128)
    o_ref[...] = jnp.dot(hh, w2c_ref[...], preferred_element_type=f32) + b2c_ref[...]


def fused_forward(x, pk):
    """x: (B, W*H) float32, pk: packed weight dict -> (B, 128) slab."""
    B, S = x.shape
    NO = pk["b2c"].shape[1]
    BT = B if B <= 128 else 128
    # TODO(synk): pad the batch to a multiple of BT if B > 128 and not divisible.
    grid = (pl.cdiv(B, BT),)

    def full(shape):
        nd = len(shape)
        return pl.BlockSpec(shape, lambda i, _n=nd: (0,) * _n)

    weights = (pk["m1"], pk["b1"], pk["m2"], pk["b2"], pk["fcw"], pk["fcb"],
               pk["w1c"], pk["b1c"], pk["w2c"], pk["b2c"])
    flops = 2 * B * sum(w.shape[0] * w.shape[1]
                        for w in (pk["m1"], pk["m2"], pk["fcw"], pk["w1c"], pk["w2c"]))
    bytes_acc = 4 * (x.size + sum(int(w.size) for w in weights) + B * NO)

    return pl.pallas_call(
        _fused_kernel,
        out_shape=jax.ShapeDtypeStruct((B, NO), jnp.float32),
        grid=grid,
        in_specs=[pl.BlockSpec((BT, S), lambda i: (i, 0))]
                 + [full(w.shape) for w in weights],
        out_specs=pl.BlockSpec((BT, NO), lambda i: (i, 0)),
        compiler_params=pltpu.CompilerParams(dimension_semantics=("parallel",)),
        cost_estimate=pl.CostEstimate(flops=flops, transcendentals=0,
                                      bytes_accessed=bytes_acc),
    )(x, *weights)


# ----------------------------------------------------------------------------
# One-time weight preprocessing (numpy; NOT traced into the per-call path).
# ----------------------------------------------------------------------------
def prepare_packed(params, w, h, lanes=128):
    c1w = np.asarray(params["c1_w"], np.float32)
    c1b = np.asarray(params["c1_b"], np.float32)
    c2w = np.asarray(params["c2_w"], np.float32)
    c2b = np.asarray(params["c2_b"], np.float32)
    C1, _, K, _ = c1w.shape
    C2 = c2w.shape[0]
    OH1, OW1 = _conv_out(w), _conv_out(h)
    OH2, OW2 = _conv_out(OH1), _conv_out(OW1)
    P1, P2 = OH1 * OW1, OH2 * OW2

    def fold(cw, in_h, in_w, out_h, out_w, cin):
        """Fold im2col (k=3, stride=2, pad=1) into the conv weight."""
        cout = cw.shape[0]
        m = np.zeros((in_h * in_w * cin, out_h * out_w * cout), np.float32)
        for orr in range(out_h):
            for occ in range(out_w):
                p = orr * out_w + occ
                for ti in range(K):
                    for tj in range(K):
                        r = 2 * orr - 1 + ti
                        c = 2 * occ - 1 + tj
                        if 0 <= r < in_h and 0 <= c < in_w:
                            pin = r * in_w + c
                            m[pin * cin:(pin + 1) * cin,
                              p * cout:(p + 1) * cout] += cw[:, :, ti, tj].T
        return m

    m1 = fold(c1w, w, h, OH1, OW1, 1)            # (W*H,   P1*C1)
    m2 = fold(c2w, OH1, OW1, OH2, OW2, C1)       # (P1*C1, P2*C2)
    b1 = np.tile(c1b, P1).reshape(1, -1)
    b2 = np.tile(c2b, P2).reshape(1, -1)

    # fc: PyTorch flattens NCHW (channel-major); kernel layout is position-major.
    fcw = np.asarray(params["fc_w"], np.float32)          # (C2*P2, F), NCHW rows
    F = fcw.shape[1]
    fcw = fcw.reshape(C2, P2, F).transpose(1, 0, 2).reshape(P2 * C2, F)
    fcb = np.asarray(params["fc_b"], np.float32).reshape(1, F)

    # heads packed into two matmuls; block-diagonal layer2; lane-dense output.
    hid = params["p1_w"].shape[1]
    out_size = params["p2_w"].shape[1]
    assert out_size + 1 <= lanes
    pad = lanes - (out_size + 1)
    w1c = np.concatenate([np.asarray(params["p1_w"]), np.asarray(params["v1_w"])], axis=1)
    b1c = np.concatenate([np.asarray(params["p1_b"]), np.asarray(params["v1_b"])], axis=1)
    top = np.concatenate([np.asarray(params["p2_w"]),
                          np.zeros((hid, 1 + pad), np.float32)], axis=1)
    bot = np.concatenate([np.zeros((hid, out_size), np.float32),
                          np.asarray(params["v2_w"]),
                          np.zeros((hid, pad), np.float32)], axis=1)
    w2c = np.concatenate([top, bot], axis=0)               # (2*hid, lanes)
    b2c = np.concatenate([np.asarray(params["p2_b"]), np.asarray(params["v2_b"]),
                          np.zeros((1, pad), np.float32)], axis=1)

    pk = dict(m1=m1, b1=b1, m2=m2, b2=b2, fcw=fcw, fcb=fcb,
              w1c=w1c, b1c=b1c, w2c=w2c, b2c=b2c)
    return {k: jnp.asarray(v, jnp.float32) for k, v in pk.items()}


# ----------------------------------------------------------------------------
# Representation.forward (jitted path contains only reshape + the kernel + 2 slices)
# ----------------------------------------------------------------------------
@functools.partial(jax.jit, static_argnames=("out_size",))
def representation_forward(packed, obs, out_size):
    x = obs.astype(jnp.float32).reshape(-1, packed["m1"].shape[0])  # obs.view(-1,1,w,h), flat
    out = fused_forward(x, packed)                                  # (B, 128) lane-dense slab
    return out[:, :out_size], out[:, out_size:out_size + 1]


# ----------------------------------------------------------------------------
# Parameter init (deterministic; kaiming fan_in/relu weights, small biases)
# ----------------------------------------------------------------------------
def make_params(key, w, h, output_size):
    ks = jax.random.split(key, 14)
    c1, c2, kk = 16, 32, 3
    oh2, ow2 = _conv_out(_conv_out(w)), _conv_out(_conv_out(h))
    flat = c2 * oh2 * ow2
    kaiming = lambda k_, s, fan: jax.random.normal(k_, s, jnp.float32) * np.sqrt(2.0 / fan)
    small = lambda k_, s: 0.05 * jax.random.normal(k_, s, jnp.float32)
    return {
        # encoder (representative; see NOTE at top of file)
        "c1_w": kaiming(ks[0], (c1, 1, kk, kk), 1 * kk * kk),
        "c1_b": small(ks[1], (c1,)),
        "c2_w": kaiming(ks[2], (c2, c1, kk, kk), c1 * kk * kk),
        "c2_b": small(ks[3], (c2,)),
        "fc_w": kaiming(ks[4], (flat, output_size), flat),
        "fc_b": small(ks[5], (1, output_size)),
        # policy_net: Linear(output_size, 32) -> ReLU -> Linear(32, output_size)
        "p1_w": kaiming(ks[6], (output_size, 32), output_size),
        "p1_b": small(ks[7], (1, 32)),
        "p2_w": kaiming(ks[8], (32, output_size), 32),
        "p2_b": small(ks[9], (1, output_size)),
        # value_net: Linear(output_size, 32) -> ReLU -> Linear(32, 1)
        "v1_w": kaiming(ks[10], (output_size, 32), output_size),
        "v1_b": small(ks[11], (1, 32)),
        "v2_w": kaiming(ks[12], (32, 1), 32),
        "v2_b": small(ks[13], (1, 1)),
    }


# Pure-JAX reference (NCHW convs + NCHW flatten, mirrors the PyTorch module).
def reference_forward(params, obs, w, h):
    hi = jax.lax.Precision.HIGHEST
    x = obs.astype(jnp.float32).reshape(-1, 1, w, h)

    def conv(t, wgt, b):
        y = jax.lax.conv_general_dilated(
            t, wgt, window_strides=(2, 2), padding=((1, 1), (1, 1)),
            dimension_numbers=("NCHW", "OIHW", "NCHW"), precision=hi)
        return jnp.maximum(y + b.reshape(1, -1, 1, 1), 0.0)

    dot = lambda a, b: jnp.dot(a, b, precision=hi)
    h1 = conv(x, params["c1_w"], params["c1_b"])
    h2 = conv(h1, params["c2_w"], params["c2_b"])
    flat = h2.reshape(h2.shape[0], -1)
    z = jnp.maximum(dot(flat, params["fc_w"]) + params["fc_b"], 0.0)
    pol = dot(jnp.maximum(dot(z, params["p1_w"]) + params["p1_b"], 0.0),
              params["p2_w"]) + params["p2_b"]
    val = dot(jnp.maximum(dot(z, params["v1_w"]) + params["v1_b"], 0.0),
              params["v2_w"]) + params["v2_b"]
    return pol, val


if __name__ == "__main__":
    batch, W, H, output_size = 2, 16, 16, 16

    key = jax.random.PRNGKey(0)
    k_param, k_obs = jax.random.split(key)
    params = make_params(k_param, W, H, output_size)
    obs = jax.random.uniform(k_obs, (batch, W, H), dtype=jnp.float32)

    packed = prepare_packed(params, W, H)   # one-time weight packing, outside jit
    policy, value = jax.block_until_ready(
        representation_forward(packed, obs, out_size=output_size))

    pol_ref, val_ref = reference_forward(params, obs, W, H)
    assert policy.shape == (batch, output_size), policy.shape
    assert value.shape == (batch, 1), value.shape
    np.testing.assert_allclose(np.asarray(policy), np.asarray(pol_ref), atol=2e-4, rtol=2e-4)
    np.testing.assert_allclose(np.asarray(value), np.asarray(val_ref), atol=2e-4, rtol=2e-4)

    print("KERNEL_OK")
</pallas_src>

<mosaic_0001>
module attributes {stable_mosaic.version = 11 : i64} {
  func.func @_fused_kernel(%arg0: i32, %arg1: memref<2x256xf32, #tpu.memory_space<vmem>>, %arg2: memref<256x1024xf32, #tpu.memory_space<vmem>>, %arg3: memref<1x1024xf32, #tpu.memory_space<vmem>>, %arg4: memref<1024x512xf32, #tpu.memory_space<vmem>>, %arg5: memref<1x512xf32, #tpu.memory_space<vmem>>, %arg6: memref<512x16xf32, #tpu.memory_space<vmem>>, %arg7: memref<1x16xf32, #tpu.memory_space<vmem>>, %arg8: memref<16x64xf32, #tpu.memory_space<vmem>>, %arg9: memref<1x64xf32, #tpu.memory_space<vmem>>, %arg10: memref<64x128xf32, #tpu.memory_space<vmem>>, %arg11: memref<1x128xf32, #tpu.memory_space<vmem>>, %arg12: memref<2x128xf32, #tpu.memory_space<vmem>>) attributes {dimension_semantics = [#tpu.dimension_semantics<parallel>], iteration_bounds = array<i64: 1>, scalar_prefetch = 0 : i64, scratch_operands = 0 : i64, tpu.core_type = #tpu.core_type<tc>, window_params = [{transform_indices = @transform_0, window_bounds = array<i64: 2, 256>}, {pipeline_mode = #tpu.pipeline_mode<synchronous>, transform_indices = @transform_1, window_bounds = array<i64: 256, 1024>}, {pipeline_mode = #tpu.pipeline_mode<synchronous>, transform_indices = @transform_2, window_bounds = array<i64: 1, 1024>}, {pipeline_mode = #tpu.pipeline_mode<synchronous>, transform_indices = @transform_3, window_bounds = array<i64: 1024, 512>}, {pipeline_mode = #tpu.pipeline_mode<synchronous>, transform_indices = @transform_4, window_bounds = array<i64: 1, 512>}, {pipeline_mode = #tpu.pipeline_mode<synchronous>, transform_indices = @transform_5, window_bounds = array<i64: 512, 16>}, {pipeline_mode = #tpu.pipeline_mode<synchronous>, transform_indices = @transform_6, window_bounds = array<i64: 1, 16>}, {pipeline_mode = #tpu.pipeline_mode<synchronous>, transform_indices = @transform_7, window_bounds = array<i64: 16, 64>}, {pipeline_mode = #tpu.pipeline_mode<synchronous>, transform_indices = @transform_8, window_bounds = array<i64: 1, 64>}, {pipeline_mode = #tpu.pipeline_mode<synchronous>, transform_indices = @transform_9, window_bounds = array<i64: 64, 128>}, {pipeline_mode = #tpu.pipeline_mode<synchronous>, transform_indices = @transform_10, window_bounds = array<i64: 1, 128>}, {transform_indices = @transform_11, window_bounds = array<i64: 2, 128>}]} {
    %c0 = arith.constant 0 : index
    %c0_0 = arith.constant 0 : index
    %0 = vector.load %arg1[%c0, %c0_0] : memref<2x256xf32, #tpu.memory_space<vmem>>, vector<2x256xf32>
    %c0_1 = arith.constant 0 : index
    %c0_2 = arith.constant 0 : index
    %1 = vector.load %arg2[%c0_1, %c0_2] : memref<256x1024xf32, #tpu.memory_space<vmem>>, vector<256x1024xf32>
    %cst = arith.constant dense<0.000000e+00> : vector<2x1024xf32>
    %2 = tpu.matmul %0, %1, %cst {dimension_numbers = #tpu.dot_dimension_numbers<[1], [0], [0], [1], [0, 0, 1, 1], [], []>} : vector<2x256xf32>, vector<256x1024xf32>, vector<2x1024xf32> -> vector<2x1024xf32>
    %c0_3 = arith.constant 0 : index
    %c0_4 = arith.constant 0 : index
    %3 = vector.load %arg3[%c0_3, %c0_4] : memref<1x1024xf32, #tpu.memory_space<vmem>>, vector<1x1024xf32>
    %4 = vector.broadcast %3 : vector<1x1024xf32> to vector<2x1024xf32>
    %5 = arith.addf %2, %4 : vector<2x1024xf32>
    %cst_5 = arith.constant 0.000000e+00 : f32
    %6 = vector.broadcast %cst_5 : f32 to vector<2x1024xf32>
    %7 = arith.maximumf %5, %6 : vector<2x1024xf32>
    %c0_6 = arith.constant 0 : index
    %c0_7 = arith.constant 0 : index
    %8 = vector.load %arg4[%c0_6, %c0_7] : memref<1024x512xf32, #tpu.memory_space<vmem>>, vector<1024x512xf32>
    %cst_8 = arith.constant dense<0.000000e+00> : vector<2x512xf32>
    %9 = tpu.matmul %7, %8, %cst_8 {dimension_numbers = #tpu.dot_dimension_numbers<[1], [0], [0], [1], [0, 0, 1, 1], [], []>} : vector<2x1024xf32>, vector<1024x512xf32>, vector<2x512xf32> -> vector<2x512xf32>
    %c0_9 = arith.constant 0 : index
    %c0_10 = arith.constant 0 : index
    %10 = vector.load %arg5[%c0_9, %c0_10] : memref<1x512xf32, #tpu.memory_space<vmem>>, vector<1x512xf32>
    %11 = vector.broadcast %10 : vector<1x512xf32> to vector<2x512xf32>
    %12 = arith.addf %9, %11 : vector<2x512xf32>
    %cst_11 = arith.constant 0.000000e+00 : f32
    %13 = vector.broadcast %cst_11 : f32 to vector<2x512xf32>
    %14 = arith.maximumf %12, %13 : vector<2x512xf32>
    %c0_12 = arith.constant 0 : index
    %c0_13 = arith.constant 0 : index
    %15 = vector.load %arg6[%c0_12, %c0_13] : memref<512x16xf32, #tpu.memory_space<vmem>>, vector<512x16xf32>
    %cst_14 = arith.constant dense<0.000000e+00> : vector<2x16xf32>
    %16 = tpu.matmul %14, %15, %cst_14 {dimension_numbers = #tpu.dot_dimension_numbers<[1], [0], [0], [1], [0, 0, 1, 1], [], []>} : vector<2x512xf32>, vector<512x16xf32>, vector<2x16xf32> -> vector<2x16xf32>
    %c0_15 = arith.constant 0 : index
    %c0_16 = arith.constant 0 : index
    %17 = vector.load %arg7[%c0_15, %c0_16] : memref<1x16xf32, #tpu.memory_space<vmem>>, vector<1x16xf32>
    %18 = vector.broadcast %17 : vector<1x16xf32> to vector<2x16xf32>
    %19 = arith.addf %16, %18 : vector<2x16xf32>
    %cst_17 = arith.constant 0.000000e+00 : f32
    %20 = vector.broadcast %cst_17 : f32 to vector<2x16xf32>
    %21 = arith.maximumf %19, %20 : vector<2x16xf32>
    %c0_18 = arith.constant 0 : index
    %c0_19 = arith.constant 0 : index
    %22 = vector.load %arg8[%c0_18, %c0_19] : memref<16x64xf32, #tpu.memory_space<vmem>>, vector<16x64xf32>
    %cst_20 = arith.constant dense<0.000000e+00> : vector<2x64xf32>
    %23 = tpu.matmul %21, %22, %cst_20 {dimension_numbers = #tpu.dot_dimension_numbers<[1], [0], [0], [1], [0, 0, 1, 1], [], []>} : vector<2x16xf32>, vector<16x64xf32>, vector<2x64xf32> -> vector<2x64xf32>
    %c0_21 = arith.constant 0 : index
    %c0_22 = arith.constant 0 : index
    %24 = vector.load %arg9[%c0_21, %c0_22] : memref<1x64xf32, #tpu.memory_space<vmem>>, vector<1x64xf32>
    %25 = vector.broadcast %24 : vector<1x64xf32> to vector<2x64xf32>
    %26 = arith.addf %23, %25 : vector<2x64xf32>
    %cst_23 = arith.constant 0.000000e+00 : f32
    %27 = vector.broadcast %cst_23 : f32 to vector<2x64xf32>
    %28 = arith.maximumf %26, %27 : vector<2x64xf32>
    %c0_24 = arith.constant 0 : index
    %c0_25 = arith.constant 0 : index
    %29 = vector.load %arg10[%c0_24, %c0_25] : memref<64x128xf32, #tpu.memory_space<vmem>>, vector<64x128xf32>
    %cst_26 = arith.constant dense<0.000000e+00> : vector<2x128xf32>
    %30 = tpu.matmul %28, %29, %cst_26 {dimension_numbers = #tpu.dot_dimension_numbers<[1], [0], [0], [1], [0, 0, 1, 1], [], []>} : vector<2x64xf32>, vector<64x128xf32>, vector<2x128xf32> -> vector<2x128xf32>
    %c0_27 = arith.constant 0 : index
    %c0_28 = arith.constant 0 : index
    %31 = vector.load %arg11[%c0_27, %c0_28] : memref<1x128xf32, #tpu.memory_space<vmem>>, vector<1x128xf32>
    %32 = vector.broadcast %31 : vector<1x128xf32> to vector<2x128xf32>
    %33 = arith.addf %30, %32 : vector<2x128xf32>
    %c0_29 = arith.constant 0 : index
    %c0_30 = arith.constant 0 : index
    %34 = vector.load %arg12[%c0_29, %c0_30] : memref<2x128xf32, #tpu.memory_space<vmem>>, vector<2x128xf32>
    tpu.vector_store %arg12[%c0_29, %c0_30], %33 {strides = array<i32>} : memref<2x128xf32, #tpu.memory_space<vmem>>, vector<2x128xf32>,
    return
  }
  func.func @transform_0(%arg0: i32) -> (i32, i32) {
    %c0_i32 = arith.constant 0 : i32
    %c0_i32_0 = arith.constant 0 : i32
    return %arg0, %c0_i32 : i32, i32
  }
  func.func @transform_1(%arg0: i32) -> (i32, i32) {
    %c0_i32 = arith.constant 0 : i32
    %c0_i32_0 = arith.constant 0 : i32
    %c0_i32_1 = arith.constant 0 : i32
    return %c0_i32, %c0_i32_0 : i32, i32
  }
  func.func @transform_2(%arg0: i32) -> (i32, i32) {
    %c0_i32 = arith.constant 0 : i32
    %c0_i32_0 = arith.constant 0 : i32
    %c0_i32_1 = arith.constant 0 : i32
    return %c0_i32, %c0_i32_0 : i32, i32
  }
  func.func @transform_3(%arg0: i32) -> (i32, i32) {
    %c0_i32 = arith.constant 0 : i32
    %c0_i32_0 = arith.constant 0 : i32
    %c0_i32_1 = arith.constant 0 : i32
    return %c0_i32, %c0_i32_0 : i32, i32
  }
  func.func @transform_4(%arg0: i32) -> (i32, i32) {
    %c0_i32 = arith.constant 0 : i32
    %c0_i32_0 = arith.constant 0 : i32
    %c0_i32_1 = arith.constant 0 : i32
    return %c0_i32, %c0_i32_0 : i32, i32
  }
  func.func @transform_5(%arg0: i32) -> (i32, i32) {
    %c0_i32 = arith.constant 0 : i32
    %c0_i32_0 = arith.constant 0 : i32
    %c0_i32_1 = arith.constant 0 : i32
    return %c0_i32, %c0_i32_0 : i32, i32
  }
  func.func @transform_6(%arg0: i32) -> (i32, i32) {
    %c0_i32 = arith.constant 0 : i32
    %c0_i32_0 = arith.constant 0 : i32
    %c0_i32_1 = arith.constant 0 : i32
    return %c0_i32, %c0_i32_0 : i32, i32
  }
  func.func @transform_7(%arg0: i32) -> (i32, i32) {
    %c0_i32 = arith.constant 0 : i32
    %c0_i32_0 = arith.constant 0 : i32
    %c0_i32_1 = arith.constant 0 : i32
    return %c0_i32, %c0_i32_0 : i32, i32
  }
  func.func @transform_8(%arg0: i32) -> (i32, i32) {
    %c0_i32 = arith.constant 0 : i32
    %c0_i32_0 = arith.constant 0 : i32
    %c0_i32_1 = arith.constant 0 : i32
    return %c0_i32, %c0_i32_0 : i32, i32
  }
  func.func @transform_9(%arg0: i32) -> (i32, i32) {
    %c0_i32 = arith.constant 0 : i32
    %c0_i32_0 = arith.constant 0 : i32
    %c0_i32_1 = arith.constant 0 : i32
    return %c0_i32, %c0_i32_0 : i32, i32
  }
  func.func @transform_10(%arg0: i32) -> (i32, i32) {
    %c0_i32 = arith.constant 0 : i32
    %c0_i32_0 = arith.constant 0 : i32
    %c0_i32_1 = arith.constant 0 : i32
    return %c0_i32, %c0_i32_0 : i32, i32
  }
  func.func @transform_11(%arg0: i32) -> (i32, i32) {
    %c0_i32 = arith.constant 0 : i32
    %c0_i32_0 = arith.constant 0 : i32
    return %arg0, %c0_i32 : i32, i32
  }
}

</mosaic_0001>

<llo_original>
// kernel: representation_forward.1
$region0: #{representation_forward.1}
  #allocation0 [shape = 'u32[]', space=smem, size = 0x4, offset = 0x4, fixed_abs, tag = 'smem constant byte address 0x4 - core index']
  #allocation1 [shape = 'u32[72,128]{1,0:T(1,128)}', space=vmem, size = 0x9000, scoped, tag = 'internal scratch']
  %s0 = inlined_call_operand.vmem [shape: f32[2,256], index: 0, kind: input, shape index: {}]
  %s1 = inlined_call_operand.hbm [shape: f32[256,1024], index: 1, kind: input, shape index: {}]
  %s2 = inlined_call_operand.hbm [shape: f32[1,1024], index: 2, kind: input, shape index: {}]
  %s3 = inlined_call_operand.hbm [shape: f32[1024,512], index: 3, kind: input, shape index: {}]
  %s4 = inlined_call_operand.hbm [shape: f32[1,512], index: 4, kind: input, shape index: {}]
  %s5 = inlined_call_operand.vmem [shape: f32[512,16], index: 5, kind: input, shape index: {}]
  %s6 = inlined_call_operand.hbm [shape: f32[1,16], index: 6, kind: input, shape index: {}]
  %s7 = inlined_call_operand.hbm [shape: f32[16,64], index: 7, kind: input, shape index: {}]
  %s8 = inlined_call_operand.hbm [shape: f32[1,64], index: 8, kind: input, shape index: {}]
  %s9 = inlined_call_operand.hbm [shape: f32[64,128], index: 9, kind: input, shape index: {}]
  %s10 = inlined_call_operand.hbm [shape: f32[1,128], index: 10, kind: input, shape index: {}]
  %s11 = inlined_call_operand.vmem [shape: f32[2,128], index: 11, kind: output, shape index: {}]
  %s12 = sld [smem:[#allocation0]]
  $region90: #{representation_forward.1} parent=0
    _
  %s14 = ssub.s32 1, %s12
  %s15 = scalar_select 0, %s14, %s12
  $region1: #{representation_forward.1} parent=0
    #allocation2 [shape = 'u8[1048576]{0}', space=vmem, size = 0x100000, scoped, tag = 'input window, operand 1, single buffered']
    #allocation3 [shape = 's32[1]{0}', space=sflag, size = 0x4, scoped, tag = 'scoped memory for representation_forward.1']
    #allocation4 [shape = 'u8[4096]{0}', space=vmem, size = 0x1000, scoped, tag = 'input window, operand 2, single buffered']
    #allocation5 [shape = 's32[1]{0}', space=sflag, size = 0x4, scoped, tag = 'scoped memory for representation_forward.1']
    #allocation6 [shape = 'u8[2097152]{0}', space=vmem, size = 0x200000, scoped, tag = 'input window, operand 3, single buffered']
    #allocation7 [shape = 'u8[2048]{0}', space=vmem, size = 0x800, scoped, tag = 'input window, operand 4, single buffered']
    #allocation8 [shape = 's32[1]{0}', space=sflag, size = 0x4, scoped, tag = 'scoped memory for representation_forward.1']
    #allocation9 [shape = 'u8[512]{0}', space=vmem, size = 0x400, scoped, tag = 'input window, operand 6, single buffered']
    #allocation10 [shape = 'u8[8192]{0}', space=vmem, size = 0x2000, scoped, tag = 'input window, operand 7, single buffered']
    #allocation11 [shape = 's32[1]{0}', space=sflag, size = 0x4, scoped, tag = 'scoped memory for representation_forward.1']
    #allocation12 [shape = 'u8[512]{0}', space=vmem, size = 0x400, scoped, tag = 'input window, operand 8, single buffered']
    #allocation13 [shape = 'u8[32768]{0}', space=vmem, size = 0x8000, scoped, tag = 'input window, operand 9, single buffered']
    #allocation14 [shape = 's32[1]{0}', space=sflag, size = 0x4, scoped, tag = 'scoped memory for representation_forward.1']
    #allocation15 [shape = 'u8[512]{0}', space=vmem, size = 0x400, scoped, tag = 'input window, operand 10, single buffered']
    %16 = vsyncpa [#allocation3], 0
    %17 = vsyncpa [#allocation5], 0
    %18 = vsyncpa [#allocation8], 0
    %19 = vsyncpa [#allocation11], 0
    %20 = vsyncpa [#allocation14], 0
    // Predicated region
    $region2: #{representation_forward.1} parent=1 // pred_check
      _
    $region3: #{representation_forward.1} parent=1 // pred_check_branch
      %22 = sbr.rel (0) target = $region5
    $region4: #{representation_forward.1} parent=1 // pred_region
      _
    $region5: #{representation_forward.1} parent=1 // pred_fallthru
      _
    // Predicated region
    $region6: #{representation_forward.1} parent=1 // pred_check
      _
    $region7: #{representation_forward.1} parent=1 // pred_check_branch
      %24 = sbr.rel (0) target = $region9
    $region8: #{representation_forward.1} parent=1 // pred_region
      %26 = vsyncadd [#allocation3], 0
      %s27 = sshll.u32 %s1, 4
      %s28 = int_to_ptr.hbm [resolvable:$true] %s27
      %s29 = sshll.u32 [#allocation2], 4
      %s30 = int_to_ptr.vmem [resolvable:$true] %s29
      %35 = dma.hbm_to_vmem [thread:$0]  %s28, 32768, %s30, [#allocation3], 1024, 1024, 64
    $region9: #{representation_forward.1} parent=1 // pred_fallthru
      _
    // Predicated region
    $region10: #{representation_forward.1} parent=1 // pred_check
      _
    $region11: #{representation_forward.1} parent=1 // pred_check_branch
      %37 = sbr.rel (0) target = $region13
    $region12: #{representation_forward.1} parent=1 // pred_region
      %39 = vsyncadd [#allocation5], 0
      %s41 = sshll.u32 %s2, 4
      %s42 = int_to_ptr.hbm [resolvable:$true] %s41
      %s43 = sshll.u32 [#allocation4], 4
      %s44 = int_to_ptr.vmem [resolvable:$true] %s43
      %46 = dma.hbm_to_vmem [thread:$0]  %s42, 128, %s44, [#allocation5]
    $region13: #{representation_forward.1} parent=1 // pred_fallthru
      _
    // Predicated region
    $region14: #{representation_forward.1} parent=1 // pred_check
      _
    $region15: #{representation_forward.1} parent=1 // pred_check_branch
      %48 = sbr.rel (0) target = $region17
    $region16: #{representation_forward.1} parent=1 // pred_region
      %50 = vsyncadd [#allocation5], 0
      %s51 = sshll.u32 %s3, 4
      %s52 = int_to_ptr.hbm [resolvable:$true] %s51
      %s53 = sshll.u32 [#allocation6], 4
      %s54 = int_to_ptr.vmem [resolvable:$true] %s53
      %59 = dma.hbm_to_vmem [thread:$0]  %s52, 65536, %s54, [#allocation5], 512, 512, 32
    $region17: #{representation_forward.1} parent=1 // pred_fallthru
      _
    // Predicated region
    $region18: #{representation_forward.1} parent=1 // pred_check
      _
    $region19: #{representation_forward.1} parent=1 // pred_check_branch
      %61 = sbr.rel (0) target = $region21
    $region20: #{representation_forward.1} parent=1 // pred_region
      %63 = vsyncadd [#allocation8], 0
      %s65 = sshll.u32 %s4, 4
      %s66 = int_to_ptr.hbm [resolvable:$true] %s65
      %s67 = sshll.u32 [#allocation7], 4
      %s68 = int_to_ptr.vmem [resolvable:$true] %s67
      %70 = dma.hbm_to_vmem [thread:$0]  %s66, 64, %s68, [#allocation8]
    $region21: #{representation_forward.1} parent=1 // pred_fallthru
      _
    // Predicated region
    $region22: #{representation_forward.1} parent=1 // pred_check
      _
    $region23: #{representation_forward.1} parent=1 // pred_check_branch
      %72 = sbr.rel (0) target = $region25
    $region24: #{representation_forward.1} parent=1 // pred_region
      _
    $region25: #{representation_forward.1} parent=1 // pred_fallthru
      _
    // Predicated region
    $region26: #{representation_forward.1} parent=1 // pred_check
      _
    $region27: #{representation_forward.1} parent=1 // pred_check_branch
      %74 = sbr.rel (0) target = $region29
    $region28: #{representation_forward.1} parent=1 // pred_region
      %76 = vsyncadd [#allocation8], 0
      %s78 = sshll.u32 %s6, 4
      %s79 = int_to_ptr.hbm [resolvable:$true] %s78
      %s80 = sshll.u32 [#allocation9], 4
      %s81 = int_to_ptr.vmem [resolvable:$true] %s80
      %83 = dma.hbm_to_vmem [thread:$0]  %s79, 16, %s81, [#allocation8]
    $region29: #{representation_forward.1} parent=1 // pred_fallthru
      _
    // Predicated region
    $region30: #{representation_forward.1} parent=1 // pred_check
      _
    $region31: #{representation_forward.1} parent=1 // pred_check_branch
      %85 = sbr.rel (0) target = $region33
    $region32: #{representation_forward.1} parent=1 // pred_region
      %87 = vsyncadd [#allocation11], 0
      %s88 = sshll.u32 %s7, 4
      %s89 = int_to_ptr.hbm [resolvable:$true] %s88
      %s90 = sshll.u32 [#allocation10], 4
      %s91 = int_to_ptr.vmem [resolvable:$true] %s90
      %96 = dma.hbm_to_vmem [thread:$0]  %s89, 256, %s91, [#allocation11], 128, 128, 8
    $region33: #{representation_forward.1} parent=1 // pred_fallthru
      _
    // Predicated region
    $region34: #{representation_forward.1} parent=1 // pred_check
      _
    $region35: #{representation_forward.1} parent=1 // pred_check_branch
      %98 = sbr.rel (0) target = $region37
    $region36: #{representation_forward.1} parent=1 // pred_region
      %100 = vsyncadd [#allocation11], 0
      %s102 = sshll.u32 %s8, 4
      %s103 = int_to_ptr.hbm [resolvable:$true] %s102
      %s104 = sshll.u32 [#allocation12], 4
      %s105 = int_to_ptr.vmem [resolvable:$true] %s104
      %107 = dma.hbm_to_vmem [thread:$0]  %s103, 16, %s105, [#allocation11]
    $region37: #{representation_forward.1} parent=1 // pred_fallthru
      _
    // Predicated region
    $region38: #{representation_forward.1} parent=1 // pred_check
      _
    $region39: #{representation_forward.1} parent=1 // pred_check_branch
      %109 = sbr.rel (0) target = $region41
    $region40: #{representation_forward.1} parent=1 // pred_region
      %111 = vsyncadd [#allocation14], 0
      %s112 = sshll.u32 %s9, 4
      %s113 = int_to_ptr.hbm [resolvable:$true] %s112
      %s114 = sshll.u32 [#allocation13], 4
      %s115 = int_to_ptr.vmem [resolvable:$true] %s114
      %120 = dma.hbm_to_vmem [thread:$0]  %s113, 1024, %s115, [#allocation14], 128, 128, 8
    $region41: #{representation_forward.1} parent=1 // pred_fallthru
      _
    // Predicated region
    $region42: #{representation_forward.1} parent=1 // pred_check
      _
    $region43: #{representation_forward.1} parent=1 // pred_check_branch
      %122 = sbr.rel (0) target = $region45
    $region44: #{representation_forward.1} parent=1 // pred_region
      %124 = vsyncadd [#allocation14], 0
      %s126 = sshll.u32 %s10, 4
      %s127 = int_to_ptr.hbm [resolvable:$true] %s126
      %s128 = sshll.u32 [#allocation15], 4
      %s129 = int_to_ptr.vmem [resolvable:$true] %s128
      %131 = dma.hbm_to_vmem [thread:$0]  %s127, 16, %s129, [#allocation14]
    $region45: #{representation_forward.1} parent=1 // pred_fallthru
      _
    // Predicated region
    $region46: #{representation_forward.1} parent=1 // pred_check
      _
    $region47: #{representation_forward.1} parent=1 // pred_check_branch
      %133 = sbr.rel (0) target = $region49
    $region48: #{representation_forward.1} parent=1 // pred_region
      %135 = dma.done [#allocation3], 32768
    $region49: #{representation_forward.1} parent=1 // pred_fallthru
      _
    // Predicated region
    $region50: #{representation_forward.1} parent=1 // pred_check
      _
    $region51: #{representation_forward.1} parent=1 // pred_check_branch
      %137 = sbr.rel (0) target = $region53
    $region52: #{representation_forward.1} parent=1 // pred_region
      %139 = dma.done [#allocation5], 128
    $region53: #{representation_forward.1} parent=1 // pred_fallthru
      _
    // Predicated region
    $region54: #{representation_forward.1} parent=1 // pred_check
      _
    $region55: #{representation_forward.1} parent=1 // pred_check_branch
      %141 = sbr.rel (0) target = $region57
    $region56: #{representation_forward.1} parent=1 // pred_region
      %143 = dma.done [#allocation5], 65536
    $region57: #{representation_forward.1} parent=1 // pred_fallthru
      _
    // Predicated region
    $region58: #{representation_forward.1} parent=1 // pred_check
      _
    $region59: #{representation_forward.1} parent=1 // pred_check_branch
      %145 = sbr.rel (0) target = $region61
    $region60: #{representation_forward.1} parent=1 // pred_region
      %147 = dma.done [#allocation8], 64
    $region61: #{representation_forward.1} parent=1 // pred_fallthru
      _
    // Predicated region
    $region62: #{representation_forward.1} parent=1 // pred_check
      _
    $region63: #{representation_forward.1} parent=1 // pred_check_branch
      %149 = sbr.rel (0) target = $region65
    $region64: #{representation_forward.1} parent=1 // pred_region
      %151 = dma.done [#allocation8], 16
    $region65: #{representation_forward.1} parent=1 // pred_fallthru
      _
    // Predicated region
    $region66: #{representation_forward.1} parent=1 // pred_check
      _
    $region67: #{representation_forward.1} parent=1 // pred_check_branch
      %153 = sbr.rel (0) target = $region69
    $region68: #{representation_forward.1} parent=1 // pred_region
      %155 = dma.done [#allocation11], 256
    $region69: #{representation_forward.1} parent=1 // pred_fallthru
      _
    // Predicated region
    $region70: #{representation_forward.1} parent=1 // pred_check
      _
    $region71: #{representation_forward.1} parent=1 // pred_check_branch
      %157 = sbr.rel (0) target = $region73
    $region72: #{representation_forward.1} parent=1 // pred_region
      %159 = dma.done [#allocation11], 16
    $region73: #{representation_forward.1} parent=1 // pred_fallthru
      _
    // Predicated region
    $region74: #{representation_forward.1} parent=1 // pred_check
      _
    $region75: #{representation_forward.1} parent=1 // pred_check_branch
      %161 = sbr.rel (0) target = $region77
    $region76: #{representation_forward.1} parent=1 // pred_region
      %163 = dma.done [#allocation14], 1024
    $region77: #{representation_forward.1} parent=1 // pred_fallthru
      _
    // Predicated region
    $region78: #{representation_forward.1} parent=1 // pred_check
      _
    $region79: #{representation_forward.1} parent=1 // pred_check_branch
      %165 = sbr.rel (0) target = $region81
    $region80: #{representation_forward.1} parent=1 // pred_region
      %167 = dma.done [#allocation14], 16
    $region81: #{representation_forward.1} parent=1 // pred_fallthru
      _
    %v168 = vld [vmem:[%s0] sm:$0xf]
    %v169 = vld [vmem:[#allocation2] sm:$0xff]
    %v170 = vld [vmem:[#allocation2 + $0x8] sm:$0xff]
    %v171 = vld [vmem:[#allocation2 + $0x10] sm:$0xff]
    %v172 = vld [vmem:[#allocation2 + $0x18] sm:$0xff]
    %v173 = vld [vmem:[#allocation2 + $0x20] sm:$0xff]
    %v174 = vld [vmem:[#allocation2 + $0x28] sm:$0xff]
    %v175 = vld [vmem:[#allocation2 + $0x30] sm:$0xff]
    %v176 = vld [vmem:[#allocation2 + $0x38] sm:$0xff]
    %v177 = vld [vmem:[#allocation2 + $0x40] sm:$0xff]
    %v178 = vld [vmem:[#allocation2 + $0x48] sm:$0xff]
    %v179 = vld [vmem:[#allocation2 + $0x50] sm:$0xff]
    %v180 = vld [vmem:[#allocation2 + $0x58] sm:$0xff]
    %v181 = vld [vmem:[#allocation2 + $0x60] sm:$0xff]
    %v182 = vld [vmem:[#allocation2 + $0x68] sm:$0xff]
    %v183 = vld [vmem:[#allocation2 + $0x70] sm:$0xff]
    %v184 = vld [vmem:[#allocation2 + $0x78] sm:$0xff]
    %v185 = vld [vmem:[#allocation2 + $0x80] sm:$0xff]
    %v186 = vld [vmem:[#allocation2 + $0x88] sm:$0xff]
    %v187 = vld [vmem:[#allocation2 + $0x90] sm:$0xff]
    %v188 = vld [vmem:[#allocation2 + $0x98] sm:$0xff]
    %v189 = vld [vmem:[#allocation2 + $0xa0] sm:$0xff]
    %v190 = vld [vmem:[#allocation2 + $0xa8] sm:$0xff]
    %v191 = vld [vmem:[#allocation2 + $0xb0] sm:$0xff]
    %v192 = vld [vmem:[#allocation2 + $0xb8] sm:$0xff]
    %v193 = vld [vmem:[#allocation2 + $0xc0] sm:$0xff]
    %v194 = vld [vmem:[#allocation2 + $0xc8] sm:$0xff]
    %v195 = vld [vmem:[#allocation2 + $0xd0] sm:$0xff]
    %v196 = vld [vmem:[#allocation2 + $0xd8] sm:$0xff]
    %v197 = vld [vmem:[#allocation2 + $0xe0] sm:$0xff]
    %v198 = vld [vmem:[#allocation2 + $0xe8] sm:$0xff]
    %v199 = vld [vmem:[#allocation2 + $0xf0] sm:$0xff]
    %v200 = vld [vmem:[#allocation2 + $0xf8] sm:$0xff]
    %v201 = vld [vmem:[#allocation2 + $0x100] sm:$0xff]
    %v202 = vld [vmem:[#allocation2 + $0x108] sm:$0xff]
    %v203 = vld [vmem:[#allocation2 + $0x110] sm:$0xff]
    %v204 = vld [vmem:[#allocation2 + $0x118] sm:$0xff]
    %v205 = vld [vmem:[#allocation2 + $0x120] sm:$0xff]
    %v206 = vld [vmem:[#allocation2 + $0x128] sm:$0xff]
    %v207 = vld [vmem:[#allocation2 + $0x130] sm:$0xff]
    %v208 = vld [vmem:[#allocation2 + $0x138] sm:$0xff]
    %v209 = vld [vmem:[#allocation2 + $0x140] sm:$0xff]
    %v210 = vld [vmem:[#allocation2 + $0x148] sm:$0xff]
    %v211 = vld [vmem:[#allocation2 + $0x150] sm:$0xff]
    %v212 = vld [vmem:[#allocation2 + $0x158] sm:$0xff]
    %v213 = vld [vmem:[#allocation2 + $0x160] sm:$0xff]
    %v214 = vld [vmem:[#allocation2 + $0x168] sm:$0xff]
    %v215 = vld [vmem:[#allocation2 + $0x170] sm:$0xff]
    %v216 = vld [vmem:[#allocation2 + $0x178] sm:$0xff]
    %v217 = vld [vmem:[#allocation2 + $0x180] sm:$0xff]
    %v218 = vld [vmem:[#allocation2 + $0x188] sm:$0xff]
    %v219 = vld [vmem:[#allocation2 + $0x190] sm:$0xff]
    %v220 = vld [vmem:[#allocation2 + $0x198] sm:$0xff]
    %v221 = vld [vmem:[#allocation2 + $0x1a0] sm:$0xff]
    %v222 = vld [vmem:[#allocation2 + $0x1a8] sm:$0xff]
    %v223 = vld [vmem:[#allocation2 + $0x1b0] sm:$0xff]
    %v224 = vld [vmem:[#allocation2 + $0x1b8] sm:$0xff]
    %v225 = vld [vmem:[#allocation2 + $0x1c0] sm:$0xff]
    %v226 = vld [vmem:[#allocation2 + $0x1c8] sm:$0xff]
    %v227 = vld [vmem:[#allocation2 + $0x1d0] sm:$0xff]
    %v228 = vld [vmem:[#allocation2 + $0x1d8] sm:$0xff]
    %v229 = vld [vmem:[#allocation2 + $0x1e0] sm:$0xff]
    %v230 = vld [vmem:[#allocation2 + $0x1e8] sm:$0xff]
    %v231 = vld [vmem:[#allocation2 + $0x1f0] sm:$0xff]
    %v232 = vld [vmem:[#allocation2 + $0x1f8] sm:$0xff]
    %v233 = vld [vmem:[#allocation2 + $0x200] sm:$0xff]
    %v234 = vld [vmem:[#allocation2 + $0x208] sm:$0xff]
    %v235 = vld [vmem:[#allocation2 + $0x210] sm:$0xff]
    %v236 = vld [vmem:[#allocation2 + $0x218] sm:$0xff]
    %v237 = vld [vmem:[#allocation2 + $0x220] sm:$0xff]
    %v238 = vld [vmem:[#allocation2 + $0x228] sm:$0xff]
    %v239 = vld [vmem:[#allocation2 + $0x230] sm:$0xff]
    %v240 = vld [vmem:[#allocation2 + $0x238] sm:$0xff]
    %v241 = vld [vmem:[#allocation2 + $0x240] sm:$0xff]
    %v242 = vld [vmem:[#allocation2 + $0x248] sm:$0xff]
    %v243 = vld [vmem:[#allocation2 + $0x250] sm:$0xff]
    %v244 = vld [vmem:[#allocation2 + $0x258] sm:$0xff]
    %v245 = vld [vmem:[#allocation2 + $0x260] sm:$0xff]
    %v246 = vld [vmem:[#allocation2 + $0x268] sm:$0xff]
    %v247 = vld [vmem:[#allocation2 + $0x270] sm:$0xff]
    %v248 = vld [vmem:[#allocation2 + $0x278] sm:$0xff]
    %v249 = vld [vmem:[#allocation2 + $0x280] sm:$0xff]
    %v250 = vld [vmem:[#allocation2 + $0x288] sm:$0xff]
    %v251 = vld [vmem:[#allocation2 + $0x290] sm:$0xff]
    %v252 = vld [vmem:[#allocation2 + $0x298] sm:$0xff]
    %v253 = vld [vmem:[#allocation2 + $0x2a0] sm:$0xff]
    %v254 = vld [vmem:[#allocation2 + $0x2a8] sm:$0xff]
    %v255 = vld [vmem:[#allocation2 + $0x2b0] sm:$0xff]
    %v256 = vld [vmem:[#allocation2 + $0x2b8] sm:$0xff]
    %v257 = vld [vmem:[#allocation2 + $0x2c0] sm:$0xff]
    %v258 = vld [vmem:[#allocation2 + $0x2c8] sm:$0xff]
    %v259 = vld [vmem:[#allocation2 + $0x2d0] sm:$0xff]
    %v260 = vld [vmem:[#allocation2 + $0x2d8] sm:$0xff]
    %v261 = vld [vmem:[#allocation2 + $0x2e0] sm:$0xff]
    %v262 = vld [vmem:[#allocation2 + $0x2e8] sm:$0xff]
    %v263 = vld [vmem:[#allocation2 + $0x2f0] sm:$0xff]
    %v264 = vld [vmem:[#allocation2 + $0x2f8] sm:$0xff]
    %v265 = vld [vmem:[#allocation2 + $0x300] sm:$0xff]
    %v266 = vld [vmem:[#allocation2 + $0x308] sm:$0xff]
    %v267 = vld [vmem:[#allocation2 + $0x310] sm:$0xff]
    %v268 = vld [vmem:[#allocation2 + $0x318] sm:$0xff]
    %v269 = vld [vmem:[#allocation2 + $0x320] sm:$0xff]
    %v270 = vld [vmem:[#allocation2 + $0x328] sm:$0xff]
    %v271 = vld [vmem:[#allocation2 + $0x330] sm:$0xff]
    %v272 = vld [vmem:[#allocation2 + $0x338] sm:$0xff]
    %v273 = vld [vmem:[#allocation2 + $0x340] sm:$0xff]
    %v274 = vld [vmem:[#allocation2 + $0x348] sm:$0xff]
    %v275 = vld [vmem:[#allocation2 + $0x350] sm:$0xff]
    %v276 = vld [vmem:[#allocation2 + $0x358] sm:$0xff]
    %v277 = vld [vmem:[#allocation2 + $0x360] sm:$0xff]
    %v278 = vld [vmem:[#allocation2 + $0x368] sm:$0xff]
    %v279 = vld [vmem:[#allocation2 + $0x370] sm:$0xff]
    %v280 = vld [vmem:[#allocation2 + $0x378] sm:$0xff]
    %v281 = vld [vmem:[#allocation2 + $0x380] sm:$0xff]
    %v282 = vld [vmem:[#allocation2 + $0x388] sm:$0xff]
    %v283 = vld [vmem:[#allocation2 + $0x390] sm:$0xff]
    %v284 = vld [vmem:[#allocation2 + $0x398] sm:$0xff]
    %v285 = vld [vmem:[#allocation2 + $0x3a0] sm:$0xff]
    %v286 = vld [vmem:[#allocation2 + $0x3a8] sm:$0xff]
    %v287 = vld [vmem:[#allocation2 + $0x3b0] sm:$0xff]
    %v288 = vld [vmem:[#allocation2 + $0x3b8] sm:$0xff]
    %v289 = vld [vmem:[#allocation2 + $0x3c0] sm:$0xff]
    %v290 = vld [vmem:[#allocation2 + $0x3c8] sm:$0xff]
    %v291 = vld [vmem:[#allocation2 + $0x3d0] sm:$0xff]
    %v292 = vld [vmem:[#allocation2 + $0x3d8] sm:$0xff]
    %v293 = vld [vmem:[#allocation2 + $0x3e0] sm:$0xff]
    %v294 = vld [vmem:[#allocation2 + $0x3e8] sm:$0xff]
    %v295 = vld [vmem:[#allocation2 + $0x3f0] sm:$0xff]
    %v296 = vld [vmem:[#allocation2 + $0x3f8] sm:$0xff]
    %v297 = vld [vmem:[#allocation2 + $0x400] sm:$0xff]
    %v298 = vld [vmem:[#allocation2 + $0x408] sm:$0xff]
    %v299 = vld [vmem:[#allocation2 + $0x410] sm:$0xff]
    %v300 = vld [vmem:[#allocation2 + $0x418] sm:$0xff]
    %v301 = vld [vmem:[#allocation2 + $0x420] sm:$0xff]
    %v302 = vld [vmem:[#allocation2 + $0x428] sm:$0xff]
    %v303 = vld [vmem:[#allocation2 + $0x430] sm:$0xff]
    %v304 = vld [vmem:[#allocation2 + $0x438] sm:$0xff]
    %v305 = vld [vmem:[#allocation2 + $0x440] sm:$0xff]
    %v306 = vld [vmem:[#allocation2 + $0x448] sm:$0xff]
    %v307 = vld [vmem:[#allocation2 + $0x450] sm:$0xff]
    %v308 = vld [vmem:[#allocation2 + $0x458] sm:$0xff]
    %v309 = vld [vmem:[#allocation2 + $0x460] sm:$0xff]
    %v310 = vld [vmem:[#allocation2 + $0x468] sm:$0xff]
    %v311 = vld [vmem:[#allocation2 + $0x470] sm:$0xff]
    %v312 = vld [vmem:[#allocation2 + $0x478] sm:$0xff]
    %v313 = vld [vmem:[#allocation2 + $0x480] sm:$0xff]
    %v314 = vld [vmem:[#allocation2 + $0x488] sm:$0xff]
    %v315 = vld [vmem:[#allocation2 + $0x490] sm:$0xff]
    %v316 = vld [vmem:[#allocation2 + $0x498] sm:$0xff]
    %v317 = vld [vmem:[#allocation2 + $0x4a0] sm:$0xff]
    %v318 = vld [vmem:[#allocation2 + $0x4a8] sm:$0xff]
    %v319 = vld [vmem:[#allocation2 + $0x4b0] sm:$0xff]
    %v320 = vld [vmem:[#allocation2 + $0x4b8] sm:$0xff]
    %v321 = vld [vmem:[#allocation2 + $0x4c0] sm:$0xff]
    %v322 = vld [vmem:[#allocation2 + $0x4c8] sm:$0xff]
    %v323 = vld [vmem:[#allocation2 + $0x4d0] sm:$0xff]
    %v324 = vld [vmem:[#allocation2 + $0x4d8] sm:$0xff]
    %v325 = vld [vmem:[#allocation2 + $0x4e0] sm:$0xff]
    %v326 = vld [vmem:[#allocation2 + $0x4e8] sm:$0xff]
    %v327 = vld [vmem:[#allocation2 + $0x4f0] sm:$0xff]
    %v328 = vld [vmem:[#allocation2 + $0x4f8] sm:$0xff]
    %v329 = vld [vmem:[#allocation2 + $0x500] sm:$0xff]
    %v330 = vld [vmem:[#allocation2 + $0x508] sm:$0xff]
    %v331 = vld [vmem:[#allocation2 + $0x510] sm:$0xff]
    %v332 = vld [vmem:[#allocation2 + $0x518] sm:$0xff]
    %v333 = vld [vmem:[#allocation2 + $0x520] sm:$0xff]
    %v334 = vld [vmem:[#allocation2 + $0x528] sm:$0xff]
    %v335 = vld [vmem:[#allocation2 + $0x530] sm:$0xff]
    %v336 = vld [vmem:[#allocation2 + $0x538] sm:$0xff]
    %v337 = vld [vmem:[#allocation2 + $0x540] sm:$0xff]
    %v338 = vld [vmem:[#allocation2 + $0x548] sm:$0xff]
    %v339 = vld [vmem:[#allocation2 + $0x550] sm:$0xff]
    %v340 = vld [vmem:[#allocation2 + $0x558] sm:$0xff]
    %v341 = vld [vmem:[#allocation2 + $0x560] sm:$0xff]
    %v342 = vld [vmem:[#allocation2 + $0x568] sm:$0xff]
    %v343 = vld [vmem:[#allocation2 + $0x570] sm:$0xff]
    %v344 = vld [vmem:[#allocation2 + $0x578] sm:$0xff]
    %v345 = vld [vmem:[#allocation2 + $0x580] sm:$0xff]
    %v346 = vld [vmem:[#allocation2 + $0x588] sm:$0xff]
    %v347 = vld [vmem:[#allocation2 + $0x590] sm:$0xff]
    %v348 = vld [vmem:[#allocation2 + $0x598] sm:$0xff]
    %v349 = vld [vmem:[#allocation2 + $0x5a0] sm:$0xff]
    %v350 = vld [vmem:[#allocation2 + $0x5a8] sm:$0xff]
    %v351 = vld [vmem:[#allocation2 + $0x5b0] sm:$0xff]
    %v352 = vld [vmem:[#allocation2 + $0x5b8] sm:$0xff]
    %v353 = vld [vmem:[#allocation2 + $0x5c0] sm:$0xff]
    %v354 = vld [vmem:[#allocation2 + $0x5c8] sm:$0xff]
    %v355 = vld [vmem:[#allocation2 + $0x5d0] sm:$0xff]
    %v356 = vld [vmem:[#allocation2 + $0x5d8] sm:$0xff]
    %v357 = vld [vmem:[#allocation2 + $0x5e0] sm:$0xff]
    %v358 = vld [vmem:[#allocation2 + $0x5e8] sm:$0xff]
    %v359 = vld [vmem:[#allocation2 + $0x5f0] sm:$0xff]
    %v360 = vld [vmem:[#allocation2 + $0x5f8] sm:$0xff]
    %v361 = vld [vmem:[#allocation2 + $0x600] sm:$0xff]
    %v362 = vld [vmem:[#allocation2 + $0x608] sm:$0xff]
    %v363 = vld [vmem:[#allocation2 + $0x610] sm:$0xff]
    %v364 = vld [vmem:[#allocation2 + $0x618] sm:$0xff]
    %v365 = vld [vmem:[#allocation2 + $0x620] sm:$0xff]
    %v366 = vld [vmem:[#allocation2 + $0x628] sm:$0xff]
    %v367 = vld [vmem:[#allocation2 + $0x630] sm:$0xff]
    %v368 = vld [vmem:[#allocation2 + $0x638] sm:$0xff]
    %v369 = vld [vmem:[#allocation2 + $0x640] sm:$0xff]
    %v370 = vld [vmem:[#allocation2 + $0x648] sm:$0xff]
    %v371 = vld [vmem:[#allocation2 + $0x650] sm:$0xff]
    %v372 = vld [vmem:[#allocation2 + $0x658] sm:$0xff]
    %v373 = vld [vmem:[#allocation2 + $0x660] sm:$0xff]
    %v374 = vld [vmem:[#allocation2 + $0x668] sm:$0xff]
    %v375 = vld [vmem:[#allocation2 + $0x670] sm:$0xff]
    %v376 = vld [vmem:[#allocation2 + $0x678] sm:$0xff]
    %v377 = vld [vmem:[#allocation2 + $0x680] sm:$0xff]
    %v378 = vld [vmem:[#allocation2 + $0x688] sm:$0xff]
    %v379 = vld [vmem:[#allocation2 + $0x690] sm:$0xff]
    %v380 = vld [vmem:[#allocation2 + $0x698] sm:$0xff]
    %v381 = vld [vmem:[#allocation2 + $0x6a0] sm:$0xff]
    %v382 = vld [vmem:[#allocation2 + $0x6a8] sm:$0xff]
    %v383 = vld [vmem:[#allocation2 + $0x6b0] sm:$0xff]
    %v384 = vld [vmem:[#allocation2 + $0x6b8] sm:$0xff]
    %v385 = vld [vmem:[#allocation2 + $0x6c0] sm:$0xff]
    %v386 = vld [vmem:[#allocation2 + $0x6c8] sm:$0xff]
    %v387 = vld [vmem:[#allocation2 + $0x6d0] sm:$0xff]
    %v388 = vld [vmem:[#allocation2 + $0x6d8] sm:$0xff]
    %v389 = vld [vmem:[#allocation2 + $0x6e0] sm:$0xff]
    %v390 = vld [vmem:[#allocation2 + $0x6e8] sm:$0xff]
    %v391 = vld [vmem:[#allocation2 + $0x6f0] sm:$0xff]
    %v392 = vld [vmem:[#allocation2 + $0x6f8] sm:$0xff]
    %v393 = vld [vmem:[#allocation2 + $0x700] sm:$0xff]
    %v394 = vld [vmem:[#allocation2 + $0x708] sm:$0xff]
    %v395 = vld [vmem:[#allocation2 + $0x710] sm:$0xff]
    %v396 = vld [vmem:[#allocation2 + $0x718] sm:$0xff]
    %v397 = vld [vmem:[#allocation2 + $0x720] sm:$0xff]
    %v398 = vld [vmem:[#allocation2 + $0x728] sm:$0xff]
    %v399 = vld [vmem:[#allocation2 + $0x730] sm:$0xff]
    %v400 = vld [vmem:[#allocation2 + $0x738] sm:$0xff]
    %v401 = vld [vmem:[#allocation2 + $0x740] sm:$0xff]
    %v402 = vld [vmem:[#allocation2 + $0x748] sm:$0xff]
    %v403 = vld [vmem:[#allocation2 + $0x750] sm:$0xff]
    %v404 = vld [vmem:[#allocation2 + $0x758] sm:$0xff]
    %v405 = vld [vmem:[#allocation2 + $0x760] sm:$0xff]
    %v406 = vld [vmem:[#allocation2 + $0x768] sm:$0xff]
    %v407 = vld [vmem:[#allocation2 + $0x770] sm:$0xff]
    %v408 = vld [vmem:[#allocation2 + $0x778] sm:$0xff]
    %v409 = vld [vmem:[#allocation2 + $0x780] sm:$0xff]
    %v410 = vld [vmem:[#allocation2 + $0x788] sm:$0xff]
    %v411 = vld [vmem:[#allocation2 + $0x790] sm:$0xff]
    %v412 = vld [vmem:[#allocation2 + $0x798] sm:$0xff]
    %v413 = vld [vmem:[#allocation2 + $0x7a0] sm:$0xff]
    %v414 = vld [vmem:[#allocation2 + $0x7a8] sm:$0xff]
    %v415 = vld [vmem:[#allocation2 + $0x7b0] sm:$0xff]
    %v416 = vld [vmem:[#allocation2 + $0x7b8] sm:$0xff]
    %v417 = vld [vmem:[#allocation2 + $0x7c0] sm:$0xff]
    %v418 = vld [vmem:[#allocation2 + $0x7c8] sm:$0xff]
    %v419 = vld [vmem:[#allocation2 + $0x7d0] sm:$0xff]
    %v420 = vld [vmem:[#allocation2 + $0x7d8] sm:$0xff]
    %v421 = vld [vmem:[#allocation2 + $0x7e0] sm:$0xff]
    %v422 = vld [vmem:[#allocation2 + $0x7e8] sm:$0xff]
    %v423 = vld [vmem:[#allocation2 + $0x7f0] sm:$0xff]
    %v424 = vld [vmem:[#allocation2 + $0x7f8] sm:$0xff]
    %v425 = vld [vmem:[#allocation4] sm:$0xff]
    %v427 = vperm.slane %v425, 0
    %v428 = vperm.slane %v425, 1
    %v429 = vperm.slane %v425, 2
    %v430 = vperm.slane %v425, 3
    %v431 = vperm.slane %v425, 4
    %v432 = vperm.slane %v425, 5
    %v433 = vperm.slane %v425, 6
    %v434 = vperm.slane %v425, 7
    %444 = vst [vmem:[#allocation1] ss:$4 sm:$0xff] %v168
    %v445 = vld.sshfl [vmem:[#allocation1] sm:$0xff pattern:$0x73625140]
    %v446 = vld.sshfl [vmem:[#allocation1 + $0x8] sm:$0xff pattern:$0x73625140]
    %449 = vmatpush.msra.mxu0 %v289
    %450 = vmatpush.msra.mxu0 %v281
    %451 = vmatpush.msra.mxu0 %v273
    %452 = vmatpush.msra.mxu0 %v265
    %453 = vmatpush.msra.mxu0 %v257
    %454 = vmatpush.msra.mxu0 %v249
    %455 = vmatpush.msra.mxu0 %v241
    %456 = vmatpush.msra.mxu0 %v233
    %457 = vmatpush.msra.mxu0 %v225
    %458 = vmatpush.msra.mxu0 %v217
    %459 = vmatpush.msra.mxu0 %v209
    %460 = vmatpush.msra.mxu0 %v201
    %461 = vmatpush.msra.mxu0 %v193
    %462 = vmatpush.msra.mxu0 %v185
    %463 = vmatpush.msra.mxu0 %v177
    %464 = vmatpush.msra.mxu0 %v169
    %465 = vmatmul.f32.gmra.mxu0 %v445
    %v466 = vpop.f32.mrf.mxu0
    %v467 = vadd.f32 %v427, %v466
    %468 = vdwg.mxu0
    %469 = vmatpush.msra.mxu0 %v417
    %470 = vmatpush.msra.mxu0 %v409
    %471 = vmatpush.msra.mxu0 %v401
    %472 = vmatpush.msra.mxu0 %v393
    %473 = vmatpush.msra.mxu0 %v385
    %474 = vmatpush.msra.mxu0 %v377
    %475 = vmatpush.msra.mxu0 %v369
    %476 = vmatpush.msra.mxu0 %v361
    %477 = vmatpush.msra.mxu0 %v353
    %478 = vmatpush.msra.mxu0 %v345
    %479 = vmatpush.msra.mxu0 %v337
    %480 = vmatpush.msra.mxu0 %v329
    %481 = vmatpush.msra.mxu0 %v321
    %482 = vmatpush.msra.mxu0 %v313
    %483 = vmatpush.msra.mxu0 %v305
    %484 = vmatpush.msra.mxu0 %v297
    %485 = vmatmul.f32.gmra.mxu0 %v446
    %v486 = vpop.f32.mrf.mxu0
    %v487 = vadd.f32 %v467, %v486
    %488 = vdwg.mxu0
    %489 = vmatpush.msra.mxu0 %v290
    %490 = vmatpush.msra.mxu0 %v282
    %491 = vmatpush.msra.mxu0 %v274
    %492 = vmatpush.msra.mxu0 %v266
    %493 = vmatpush.msra.mxu0 %v258
    %494 = vmatpush.msra.mxu0 %v250
    %495 = vmatpush.msra.mxu0 %v242
    %496 = vmatpush.msra.mxu0 %v234
    %497 = vmatpush.msra.mxu0 %v226
    %498 = vmatpush.msra.mxu0 %v218
    %499 = vmatpush.msra.mxu0 %v210
    %500 = vmatpush.msra.mxu0 %v202
    %501 = vmatpush.msra.mxu0 %v194
    %502 = vmatpush.msra.mxu0 %v186
    %503 = vmatpush.msra.mxu0 %v178
    %504 = vmatpush.msra.mxu0 %v170
    %505 = vmatmul.f32.gmra.mxu0 %v445
    %v506 = vpop.f32.mrf.mxu0
    %v507 = vadd.f32 %v428, %v506
    %508 = vdwg.mxu0
    %509 = vmatpush.msra.mxu0 %v418
    %510 = vmatpush.msra.mxu0 %v410
    %511 = vmatpush.msra.mxu0 %v402
    %512 = vmatpush.msra.mxu0 %v394
    %513 = vmatpush.msra.mxu0 %v386
    %514 = vmatpush.msra.mxu0 %v378
    %515 = vmatpush.msra.mxu0 %v370
    %516 = vmatpush.msra.mxu0 %v362
    %517 = vmatpush.msra.mxu0 %v354
    %518 = vmatpush.msra.mxu0 %v346
    %519 = vmatpush.msra.mxu0 %v338
    %520 = vmatpush.msra.mxu0 %v330
    %521 = vmatpush.msra.mxu0 %v322
    %522 = vmatpush.msra.mxu0 %v314
    %523 = vmatpush.msra.mxu0 %v306
    %524 = vmatpush.msra.mxu0 %v298
    %525 = vmatmul.f32.gmra.mxu0 %v446
    %v526 = vpop.f32.mrf.mxu0
    %v527 = vadd.f32 %v507, %v526
    %528 = vdwg.mxu0
    %529 = vmatpush.msra.mxu0 %v291
    %530 = vmatpush.msra.mxu0 %v283
    %531 = vmatpush.msra.mxu0 %v275
    %532 = vmatpush.msra.mxu0 %v267
    %533 = vmatpush.msra.mxu0 %v259
    %534 = vmatpush.msra.mxu0 %v251
    %535 = vmatpush.msra.mxu0 %v243
    %536 = vmatpush.msra.mxu0 %v235
    %537 = vmatpush.msra.mxu0 %v227
    %538 = vmatpush.msra.mxu0 %v219
    %539 = vmatpush.msra.mxu0 %v211
    %540 = vmatpush.msra.mxu0 %v203
    %541 = vmatpush.msra.mxu0 %v195
    %542 = vmatpush.msra.mxu0 %v187
    %543 = vmatpush.msra.mxu0 %v179
    %544 = vmatpush.msra.mxu0 %v171
    %545 = vmatmul.f32.gmra.mxu0 %v445
    %v546 = vpop.f32.mrf.mxu0
    %v547 = vadd.f32 %v429, %v546
    %548 = vdwg.mxu0
    %549 = vmatpush.msra.mxu0 %v419
    %550 = vmatpush.msra.mxu0 %v411
    %551 = vmatpush.msra.mxu0 %v403
    %552 = vmatpush.msra.mxu0 %v395
    %553 = vmatpush.msra.mxu0 %v387
    %554 = vmatpush.msra.mxu0 %v379
    %555 = vmatpush.msra.mxu0 %v371
    %556 = vmatpush.msra.mxu0 %v363
    %557 = vmatpush.msra.mxu0 %v355
    %558 = vmatpush.msra.mxu0 %v347
    %559 = vmatpush.msra.mxu0 %v339
    %560 = vmatpush.msra.mxu0 %v331
    %561 = vmatpush.msra.mxu0 %v323
    %562 = vmatpush.msra.mxu0 %v315
    %563 = vmatpush.msra.mxu0 %v307
    %564 = vmatpush.msra.mxu0 %v299
    %565 = vmatmul.f32.gmra.mxu0 %v446
    %v566 = vpop.f32.mrf.mxu0
    %v567 = vadd.f32 %v547, %v566
    %568 = vdwg.mxu0
    %569 = vmatpush.msra.mxu0 %v292
    %570 = vmatpush.msra.mxu0 %v284
    %571 = vmatpush.msra.mxu0 %v276
    %572 = vmatpush.msra.mxu0 %v268
    %573 = vmatpush.msra.mxu0 %v260
    %574 = vmatpush.msra.mxu0 %v252
    %575 = vmatpush.msra.mxu0 %v244
    %576 = vmatpush.msra.mxu0 %v236
    %577 = vmatpush.msra.mxu0 %v228
    %578 = vmatpush.msra.mxu0 %v220
    %579 = vmatpush.msra.mxu0 %v212
    %580 = vmatpush.msra.mxu0 %v204
    %581 = vmatpush.msra.mxu0 %v196
    %582 = vmatpush.msra.mxu0 %v188
    %583 = vmatpush.msra.mxu0 %v180
    %584 = vmatpush.msra.mxu0 %v172
    %585 = vmatmul.f32.gmra.mxu0 %v445
    %v586 = vpop.f32.mrf.mxu0
    %v587 = vadd.f32 %v430, %v586
    %588 = vdwg.mxu0
    %589 = vmatpush.msra.mxu0 %v420
    %590 = vmatpush.msra.mxu0 %v412
    %591 = vmatpush.msra.mxu0 %v404
    %592 = vmatpush.msra.mxu0 %v396
    %593 = vmatpush.msra.mxu0 %v388
    %594 = vmatpush.msra.mxu0 %v380
    %595 = vmatpush.msra.mxu0 %v372
    %596 = vmatpush.msra.mxu0 %v364
    %597 = vmatpush.msra.mxu0 %v356
    %598 = vmatpush.msra.mxu0 %v348
    %599 = vmatpush.msra.mxu0 %v340
    %600 = vmatpush.msra.mxu0 %v332
    %601 = vmatpush.msra.mxu0 %v324
    %602 = vmatpush.msra.mxu0 %v316
    %603 = vmatpush.msra.mxu0 %v308
    %604 = vmatpush.msra.mxu0 %v300
    %605 = vmatmul.f32.gmra.mxu0 %v446
    %v606 = vpop.f32.mrf.mxu0
    %v607 = vadd.f32 %v587, %v606
    %608 = vdwg.mxu0
    %609 = vmatpush.msra.mxu0 %v293
    %610 = vmatpush.msra.mxu0 %v285
    %611 = vmatpush.msra.mxu0 %v277
    %612 = vmatpush.msra.mxu0 %v269
    %613 = vmatpush.msra.mxu0 %v261
    %614 = vmatpush.msra.mxu0 %v253
    %615 = vmatpush.msra.mxu0 %v245
    %616 = vmatpush.msra.mxu0 %v237
    %617 = vmatpush.msra.mxu0 %v229
    %618 = vmatpush.msra.mxu0 %v221
    %619 = vmatpush.msra.mxu0 %v213
    %620 = vmatpush.msra.mxu0 %v205
    %621 = vmatpush.msra.mxu0 %v197
    %622 = vmatpush.msra.mxu0 %v189
    %623 = vmatpush.msra.mxu0 %v181
    %624 = vmatpush.msra.mxu0 %v173
    %625 = vmatmul.f32.gmra.mxu0 %v445
    %v626 = vpop.f32.mrf.mxu0
    %v627 = vadd.f32 %v431, %v626
    %628 = vdwg.mxu0
    %629 = vmatpush.msra.mxu0 %v421
    %630 = vmatpush.msra.mxu0 %v413
    %631 = vmatpush.msra.mxu0 %v405
    %632 = vmatpush.msra.mxu0 %v397
    %633 = vmatpush.msra.mxu0 %v389
    %634 = vmatpush.msra.mxu0 %v381
    %635 = vmatpush.msra.mxu0 %v373
    %636 = vmatpush.msra.mxu0 %v365
    %637 = vmatpush.msra.mxu0 %v357
    %638 = vmatpush.msra.mxu0 %v349
    %639 = vmatpush.msra.mxu0 %v341
    %640 = vmatpush.msra.mxu0 %v333
    %641 = vmatpush.msra.mxu0 %v325
    %642 = vmatpush.msra.mxu0 %v317
    %643 = vmatpush.msra.mxu0 %v309
    %644 = vmatpush.msra.mxu0 %v301
    %645 = vmatmul.f32.gmra.mxu0 %v446
    %v646 = vpop.f32.mrf.mxu0
    %v647 = vadd.f32 %v627, %v646
    %648 = vdwg.mxu0
    %649 = vmatpush.msra.mxu0 %v294
    %650 = vmatpush.msra.mxu0 %v286
    %651 = vmatpush.msra.mxu0 %v278
    %652 = vmatpush.msra.mxu0 %v270
    %653 = vmatpush.msra.mxu0 %v262
    %654 = vmatpush.msra.mxu0 %v254
    %655 = vmatpush.msra.mxu0 %v246
    %656 = vmatpush.msra.mxu0 %v238
    %657 = vmatpush.msra.mxu0 %v230
    %658 = vmatpush.msra.mxu0 %v222
    %659 = vmatpush.msra.mxu0 %v214
    %660 = vmatpush.msra.mxu0 %v206
    %661 = vmatpush.msra.mxu0 %v198
    %662 = vmatpush.msra.mxu0 %v190
    %663 = vmatpush.msra.mxu0 %v182
    %664 = vmatpush.msra.mxu0 %v174
    %665 = vmatmul.f32.gmra.mxu0 %v445
    %v666 = vpop.f32.mrf.mxu0
    %v667 = vadd.f32 %v432, %v666
    %668 = vdwg.mxu0
    %669 = vmatpush.msra.mxu0 %v422
    %670 = vmatpush.msra.mxu0 %v414
    %671 = vmatpush.msra.mxu0 %v406
    %672 = vmatpush.msra.mxu0 %v398
    %673 = vmatpush.msra.mxu0 %v390
    %674 = vmatpush.msra.mxu0 %v382
    %675 = vmatpush.msra.mxu0 %v374
    %676 = vmatpush.msra.mxu0 %v366
    %677 = vmatpush.msra.mxu0 %v358
    %678 = vmatpush.msra.mxu0 %v350
    %679 = vmatpush.msra.mxu0 %v342
    %680 = vmatpush.msra.mxu0 %v334
    %681 = vmatpush.msra.mxu0 %v326
    %682 = vmatpush.msra.mxu0 %v318
    %683 = vmatpush.msra.mxu0 %v310
    %684 = vmatpush.msra.mxu0 %v302
    %685 = vmatmul.f32.gmra.mxu0 %v446
    %v686 = vpop.f32.mrf.mxu0
    %v687 = vadd.f32 %v667, %v686
    %688 = vdwg.mxu0
    %689 = vmatpush.msra.mxu0 %v295
    %690 = vmatpush.msra.mxu0 %v287
    %691 = vmatpush.msra.mxu0 %v279
    %692 = vmatpush.msra.mxu0 %v271
    %693 = vmatpush.msra.mxu0 %v263
    %694 = vmatpush.msra.mxu0 %v255
    %695 = vmatpush.msra.mxu0 %v247
    %696 = vmatpush.msra.mxu0 %v239
    %697 = vmatpush.msra.mxu0 %v231
    %698 = vmatpush.msra.mxu0 %v223
    %699 = vmatpush.msra.mxu0 %v215
    %700 = vmatpush.msra.mxu0 %v207
    %701 = vmatpush.msra.mxu0 %v199
    %702 = vmatpush.msra.mxu0 %v191
    %703 = vmatpush.msra.mxu0 %v183
    %704 = vmatpush.msra.mxu0 %v175
    %705 = vmatmul.f32.gmra.mxu0 %v445
    %v706 = vpop.f32.mrf.mxu0
    %v707 = vadd.f32 %v433, %v706
    %708 = vdwg.mxu0
    %709 = vmatpush.msra.mxu0 %v423
    %710 = vmatpush.msra.mxu0 %v415
    %711 = vmatpush.msra.mxu0 %v407
    %712 = vmatpush.msra.mxu0 %v399
    %713 = vmatpush.msra.mxu0 %v391
    %714 = vmatpush.msra.mxu0 %v383
    %715 = vmatpush.msra.mxu0 %v375
    %716 = vmatpush.msra.mxu0 %v367
    %717 = vmatpush.msra.mxu0 %v359
    %718 = vmatpush.msra.mxu0 %v351
    %719 = vmatpush.msra.mxu0 %v343
    %720 = vmatpush.msra.mxu0 %v335
    %721 = vmatpush.msra.mxu0 %v327
    %722 = vmatpush.msra.mxu0 %v319
    %723 = vmatpush.msra.mxu0 %v311
    %724 = vmatpush.msra.mxu0 %v303
    %725 = vmatmul.f32.gmra.mxu0 %v446
    %v726 = vpop.f32.mrf.mxu0
    %v727 = vadd.f32 %v707, %v726
    %728 = vdwg.mxu0
    %729 = vmatpush.msra.mxu0 %v296
    %730 = vmatpush.msra.mxu0 %v288
    %731 = vmatpush.msra.mxu0 %v280
    %732 = vmatpush.msra.mxu0 %v272
    %733 = vmatpush.msra.mxu0 %v264
    %734 = vmatpush.msra.mxu0 %v256
    %735 = vmatpush.msra.mxu0 %v248
    %736 = vmatpush.msra.mxu0 %v240
    %737 = vmatpush.msra.mxu0 %v232
    %738 = vmatpush.msra.mxu0 %v224
    %739 = vmatpush.msra.mxu0 %v216
    %740 = vmatpush.msra.mxu0 %v208
    %741 = vmatpush.msra.mxu0 %v200
    %742 = vmatpush.msra.mxu0 %v192
    %743 = vmatpush.msra.mxu0 %v184
    %744 = vmatpush.msra.mxu0 %v176
    %745 = vmatmul.f32.gmra.mxu0 %v445
    %v746 = vpop.f32.mrf.mxu0
    %v747 = vadd.f32 %v434, %v746
    %748 = vdwg.mxu0
    %749 = vmatpush.msra.mxu0 %v424
    %750 = vmatpush.msra.mxu0 %v416
    %751 = vmatpush.msra.mxu0 %v408
    %752 = vmatpush.msra.mxu0 %v400
    %753 = vmatpush.msra.mxu0 %v392
    %754 = vmatpush.msra.mxu0 %v384
    %755 = vmatpush.msra.mxu0 %v376
    %756 = vmatpush.msra.mxu0 %v368
    %757 = vmatpush.msra.mxu0 %v360
    %758 = vmatpush.msra.mxu0 %v352
    %759 = vmatpush.msra.mxu0 %v344
    %760 = vmatpush.msra.mxu0 %v336
    %761 = vmatpush.msra.mxu0 %v328
    %762 = vmatpush.msra.mxu0 %v320
    %763 = vmatpush.msra.mxu0 %v312
    %764 = vmatpush.msra.mxu0 %v304
    %765 = vmatmul.f32.gmra.mxu0 %v446
    %v766 = vpop.f32.mrf.mxu0
    %v767 = vadd.f32 %v747, %v766
    %768 = vdwg.mxu0
    %v769 = vmax.f32 %v487, 0.0
    %v770 = vmax.f32 %v527, 0.0
    %v771 = vmax.f32 %v567, 0.0
    %v772 = vmax.f32 %v607, 0.0
    %v773 = vmax.f32 %v647, 0.0
    %v774 = vmax.f32 %v687, 0.0
    %v775 = vmax.f32 %v727, 0.0
    %v776 = vmax.f32 %v767, 0.0
    %v777 = vld [vmem:[#allocation6] sm:$0xff]
    %v778 = vld [vmem:[#allocation6 + $0x8] sm:$0xff]
    %v779 = vld [vmem:[#allocation6 + $0x10] sm:$0xff]
    %v780 = vld [vmem:[#allocation6 + $0x18] sm:$0xff]
    %v781 = vld [vmem:[#allocation6 + $0x20] sm:$0xff]
    %v782 = vld [vmem:[#allocation6 + $0x28] sm:$0xff]
    %v783 = vld [vmem:[#allocation6 + $0x30] sm:$0xff]
    %v784 = vld [vmem:[#allocation6 + $0x38] sm:$0xff]
    %v785 = vld [vmem:[#allocation6 + $0x40] sm:$0xff]
    %v786 = vld [vmem:[#allocation6 + $0x48] sm:$0xff]
    %v787 = vld [vmem:[#allocation6 + $0x50] sm:$0xff]
    %v788 = vld [vmem:[#allocation6 + $0x58] sm:$0xff]
    %v789 = vld [vmem:[#allocation6 + $0x60] sm:$0xff]
    %v790 = vld [vmem:[#allocation6 + $0x68] sm:$0xff]
    %v791 = vld [vmem:[#allocation6 + $0x70] sm:$0xff]
    %v792 = vld [vmem:[#allocation6 + $0x78] sm:$0xff]
    %v793 = vld [vmem:[#allocation6 + $0x80] sm:$0xff]
    %v794 = vld [vmem:[#allocation6 + $0x88] sm:$0xff]
    %v795 = vld [vmem:[#allocation6 + $0x90] sm:$0xff]
    %v796 = vld [vmem:[#allocation6 + $0x98] sm:$0xff]
    %v797 = vld [vmem:[#allocation6 + $0xa0] sm:$0xff]
    %v798 = vld [vmem:[#allocation6 + $0xa8] sm:$0xff]
    %v799 = vld [vmem:[#allocation6 + $0xb0] sm:$0xff]
    %v800 = vld [vmem:[#allocation6 + $0xb8] sm:$0xff]
    %v801 = vld [vmem:[#allocation6 + $0xc0] sm:$0xff]
    %v802 = vld [vmem:[#allocation6 + $0xc8] sm:$0xff]
    %v803 = vld [vmem:[#allocation6 + $0xd0] sm:$0xff]
    %v804 = vld [vmem:[#allocation6 + $0xd8] sm:$0xff]
    %v805 = vld [vmem:[#allocation6 + $0xe0] sm:$0xff]
    %v806 = vld [vmem:[#allocation6 + $0xe8] sm:$0xff]
    %v807 = vld [vmem:[#allocation6 + $0xf0] sm:$0xff]
    %v808 = vld [vmem:[#allocation6 + $0xf8] sm:$0xff]
    %v809 = vld [vmem:[#allocation6 + $0x100] sm:$0xff]
    %v810 = vld [vmem:[#allocation6 + $0x108] sm:$0xff]
    %v811 = vld [vmem:[#allocation6 + $0x110] sm:$0xff]
    %v812 = vld [vmem:[#allocation6 + $0x118] sm:$0xff]
    %v813 = vld [vmem:[#allocation6 + $0x120] sm:$0xff]
    %v814 = vld [vmem:[#allocation6 + $0x128] sm:$0xff]
    %v815 = vld [vmem:[#allocation6 + $0x130] sm:$0xff]
    %v816 = vld [vmem:[#allocation6 + $0x138] sm:$0xff]
    %v817 = vld [vmem:[#allocation6 + $0x140] sm:$0xff]
    %v818 = vld [vmem:[#allocation6 + $0x148] sm:$0xff]
    %v819 = vld [vmem:[#allocation6 + $0x150] sm:$0xff]
    %v820 = vld [vmem:[#allocation6 + $0x158] sm:$0xff]
    %v821 = vld [vmem:[#allocation6 + $0x160] sm:$0xff]
    %v822 = vld [vmem:[#allocation6 + $0x168] sm:$0xff]
    %v823 = vld [vmem:[#allocation6 + $0x170] sm:$0xff]
    %v824 = vld [vmem:[#allocation6 + $0x178] sm:$0xff]
    %v825 = vld [vmem:[#allocation6 + $0x180] sm:$0xff]
    %v826 = vld [vmem:[#allocation6 + $0x188] sm:$0xff]
    %v827 = vld [vmem:[#allocation6 + $0x190] sm:$0xff]
    %v828 = vld [vmem:[#allocation6 + $0x198] sm:$0xff]
    %v829 = vld [vmem:[#allocation6 + $0x1a0] sm:$0xff]
    %v830 = vld [vmem:[#allocation6 + $0x1a8] sm:$0xff]
    %v831 = vld [vmem:[#allocation6 + $0x1b0] sm:$0xff]
    %v832 = vld [vmem:[#allocation6 + $0x1b8] sm:$0xff]
    %v833 = vld [vmem:[#allocation6 + $0x1c0] sm:$0xff]
    %v834 = vld [vmem:[#allocation6 + $0x1c8] sm:$0xff]
    %v835 = vld [vmem:[#allocation6 + $0x1d0] sm:$0xff]
    %v836 = vld [vmem:[#allocation6 + $0x1d8] sm:$0xff]
    %v837 = vld [vmem:[#allocation6 + $0x1e0] sm:$0xff]
    %v838 = vld [vmem:[#allocation6 + $0x1e8] sm:$0xff]
    %v839 = vld [vmem:[#allocation6 + $0x1f0] sm:$0xff]
    %v840 = vld [vmem:[#allocation6 + $0x1f8] sm:$0xff]
    %v841 = vld [vmem:[#allocation6 + $0x200] sm:$0xff]
    %v842 = vld [vmem:[#allocation6 + $0x208] sm:$0xff]
    %v843 = vld [vmem:[#allocation6 + $0x210] sm:$0xff]
    %v844 = vld [vmem:[#allocation6 + $0x218] sm:$0xff]
    %v845 = vld [vmem:[#allocation6 + $0x220] sm:$0xff]
    %v846 = vld [vmem:[#allocation6 + $0x228] sm:$0xff]
    %v847 = vld [vmem:[#allocation6 + $0x230] sm:$0xff]
    %v848 = vld [vmem:[#allocation6 + $0x238] sm:$0xff]
    %v849 = vld [vmem:[#allocation6 + $0x240] sm:$0xff]
    %v850 = vld [vmem:[#allocation6 + $0x248] sm:$0xff]
    %v851 = vld [vmem:[#allocation6 + $0x250] sm:$0xff]
    %v852 = vld [vmem:[#allocation6 + $0x258] sm:$0xff]
    %v853 = vld [vmem:[#allocation6 + $0x260] sm:$0xff]
    %v854 = vld [vmem:[#allocation6 + $0x268] sm:$0xff]
    %v855 = vld [vmem:[#allocation6 + $0x270] sm:$0xff]
    %v856 = vld [vmem:[#allocation6 + $0x278] sm:$0xff]
    %v857 = vld [vmem:[#allocation6 + $0x280] sm:$0xff]
    %v858 = vld [vmem:[#allocation6 + $0x288] sm:$0xff]
    %v859 = vld [vmem:[#allocation6 + $0x290] sm:$0xff]
    %v860 = vld [vmem:[#allocation6 + $0x298] sm:$0xff]
    %v861 = vld [vmem:[#allocation6 + $0x2a0] sm:$0xff]
    %v862 = vld [vmem:[#allocation6 + $0x2a8] sm:$0xff]
    %v863 = vld [vmem:[#allocation6 + $0x2b0] sm:$0xff]
    %v864 = vld [vmem:[#allocation6 + $0x2b8] sm:$0xff]
    %v865 = vld [vmem:[#allocation6 + $0x2c0] sm:$0xff]
    %v866 = vld [vmem:[#allocation6 + $0x2c8] sm:$0xff]
    %v867 = vld [vmem:[#allocation6 + $0x2d0] sm:$0xff]
    %v868 = vld [vmem:[#allocation6 + $0x2d8] sm:$0xff]
    %v869 = vld [vmem:[#allocation6 + $0x2e0] sm:$0xff]
    %v870 = vld [vmem:[#allocation6 + $0x2e8] sm:$0xff]
    %v871 = vld [vmem:[#allocation6 + $0x2f0] sm:$0xff]
    %v872 = vld [vmem:[#allocation6 + $0x2f8] sm:$0xff]
    %v873 = vld [vmem:[#allocation6 + $0x300] sm:$0xff]
    %v874 = vld [vmem:[#allocation6 + $0x308] sm:$0xff]
    %v875 = vld [vmem:[#allocation6 + $0x310] sm:$0xff]
    %v876 = vld [vmem:[#allocation6 + $0x318] sm:$0xff]
    %v877 = vld [vmem:[#allocation6 + $0x320] sm:$0xff]
    %v878 = vld [vmem:[#allocation6 + $0x328] sm:$0xff]
    %v879 = vld [vmem:[#allocation6 + $0x330] sm:$0xff]
    %v880 = vld [vmem:[#allocation6 + $0x338] sm:$0xff]
    %v881 = vld [vmem:[#allocation6 + $0x340] sm:$0xff]
    %v882 = vld [vmem:[#allocation6 + $0x348] sm:$0xff]
    %v883 = vld [vmem:[#allocation6 + $0x350] sm:$0xff]
    %v884 = vld [vmem:[#allocation6 + $0x358] sm:$0xff]
    %v885 = vld [vmem:[#allocation6 + $0x360] sm:$0xff]
    %v886 = vld [vmem:[#allocation6 + $0x368] sm:$0xff]
    %v887 = vld [vmem:[#allocation6 + $0x370] sm:$0xff]
    %v888 = vld [vmem:[#allocation6 + $0x378] sm:$0xff]
    %v889 = vld [vmem:[#allocation6 + $0x380] sm:$0xff]
    %v890 = vld [vmem:[#allocation6 + $0x388] sm:$0xff]
    %v891 = vld [vmem:[#allocation6 + $0x390] sm:$0xff]
    %v892 = vld [vmem:[#allocation6 + $0x398] sm:$0xff]
    %v893 = vld [vmem:[#allocation6 + $0x3a0] sm:$0xff]
    %v894 = vld [vmem:[#allocation6 + $0x3a8] sm:$0xff]
    %v895 = vld [vmem:[#allocation6 + $0x3b0] sm:$0xff]
    %v896 = vld [vmem:[#allocation6 + $0x3b8] sm:$0xff]
    %v897 = vld [vmem:[#allocation6 + $0x3c0] sm:$0xff]
    %v898 = vld [vmem:[#allocation6 + $0x3c8] sm:$0xff]
    %v899 = vld [vmem:[#allocation6 + $0x3d0] sm:$0xff]
    %v900 = vld [vmem:[#allocation6 + $0x3d8] sm:$0xff]
    %v901 = vld [vmem:[#allocation6 + $0x3e0] sm:$0xff]
    %v902 = vld [vmem:[#allocation6 + $0x3e8] sm:$0xff]
    %v903 = vld [vmem:[#allocation6 + $0x3f0] sm:$0xff]
    %v904 = vld [vmem:[#allocation6 + $0x3f8] sm:$0xff]
    %v905 = vld [vmem:[#allocation6 + $0x400] sm:$0xff]
    %v906 = vld [vmem:[#allocation6 + $0x408] sm:$0xff]
    %v907 = vld [vmem:[#allocation6 + $0x410] sm:$0xff]
    %v908 = vld [vmem:[#allocation6 + $0x418] sm:$0xff]
    %v909 = vld [vmem:[#allocation6 + $0x420] sm:$0xff]
    %v910 = vld [vmem:[#allocation6 + $0x428] sm:$0xff]
    %v911 = vld [vmem:[#allocation6 + $0x430] sm:$0xff]
    %v912 = vld [vmem:[#allocation6 + $0x438] sm:$0xff]
    %v913 = vld [vmem:[#allocation6 + $0x440] sm:$0xff]
    %v914 = vld [vmem:[#allocation6 + $0x448] sm:$0xff]
    %v915 = vld [vmem:[#allocation6 + $0x450] sm:$0xff]
    %v916 = vld [vmem:[#allocation6 + $0x458] sm:$0xff]
    %v917 = vld [vmem:[#allocation6 + $0x460] sm:$0xff]
    %v918 = vld [vmem:[#allocation6 + $0x468] sm:$0xff]
    %v919 = vld [vmem:[#allocation6 + $0x470] sm:$0xff]
    %v920 = vld [vmem:[#allocation6 + $0x478] sm:$0xff]
    %v921 = vld [vmem:[#allocation6 + $0x480] sm:$0xff]
    %v922 = vld [vmem:[#allocation6 + $0x488] sm:$0xff]
    %v923 = vld [vmem:[#allocation6 + $0x490] sm:$0xff]
    %v924 = vld [vmem:[#allocation6 + $0x498] sm:$0xff]
    %v925 = vld [vmem:[#allocation6 + $0x4a0] sm:$0xff]
    %v926 = vld [vmem:[#allocation6 + $0x4a8] sm:$0xff]
    %v927 = vld [vmem:[#allocation6 + $0x4b0] sm:$0xff]
    %v928 = vld [vmem:[#allocation6 + $0x4b8] sm:$0xff]
    %v929 = vld [vmem:[#allocation6 + $0x4c0] sm:$0xff]
    %v930 = vld [vmem:[#allocation6 + $0x4c8] sm:$0xff]
    %v931 = vld [vmem:[#allocation6 + $0x4d0] sm:$0xff]
    %v932 = vld [vmem:[#allocation6 + $0x4d8] sm:$0xff]
    %v933 = vld [vmem:[#allocation6 + $0x4e0] sm:$0xff]
    %v934 = vld [vmem:[#allocation6 + $0x4e8] sm:$0xff]
    %v935 = vld [vmem:[#allocation6 + $0x4f0] sm:$0xff]
    %v936 = vld [vmem:[#allocation6 + $0x4f8] sm:$0xff]
    %v937 = vld [vmem:[#allocation6 + $0x500] sm:$0xff]
    %v938 = vld [vmem:[#allocation6 + $0x508] sm:$0xff]
    %v939 = vld [vmem:[#allocation6 + $0x510] sm:$0xff]
    %v940 = vld [vmem:[#allocation6 + $0x518] sm:$0xff]
    %v941 = vld [vmem:[#allocation6 + $0x520] sm:$0xff]
    %v942 = vld [vmem:[#allocation6 + $0x528] sm:$0xff]
    %v943 = vld [vmem:[#allocation6 + $0x530] sm:$0xff]
    %v944 = vld [vmem:[#allocation6 + $0x538] sm:$0xff]
    %v945 = vld [vmem:[#allocation6 + $0x540] sm:$0xff]
    %v946 = vld [vmem:[#allocation6 + $0x548] sm:$0xff]
    %v947 = vld [vmem:[#allocation6 + $0x550] sm:$0xff]
    %v948 = vld [vmem:[#allocation6 + $0x558] sm:$0xff]
    %v949 = vld [vmem:[#allocation6 + $0x560] sm:$0xff]
    %v950 = vld [vmem:[#allocation6 + $0x568] sm:$0xff]
    %v951 = vld [vmem:[#allocation6 + $0x570] sm:$0xff]
    %v952 = vld [vmem:[#allocation6 + $0x578] sm:$0xff]
    %v953 = vld [vmem:[#allocation6 + $0x580] sm:$0xff]
    %v954 = vld [vmem:[#allocation6 + $0x588] sm:$0xff]
    %v955 = vld [vmem:[#allocation6 + $0x590] sm:$0xff]
    %v956 = vld [vmem:[#allocation6 + $0x598] sm:$0xff]
    %v957 = vld [vmem:[#allocation6 + $0x5a0] sm:$0xff]
    %v958 = vld [vmem:[#allocation6 + $0x5a8] sm:$0xff]
    %v959 = vld [vmem:[#allocation6 + $0x5b0] sm:$0xff]
    %v960 = vld [vmem:[#allocation6 + $0x5b8] sm:$0xff]
    %v961 = vld [vmem:[#allocation6 + $0x5c0] sm:$0xff]
    %v962 = vld [vmem:[#allocation6 + $0x5c8] sm:$0xff]
    %v963 = vld [vmem:[#allocation6 + $0x5d0] sm:$0xff]
    %v964 = vld [vmem:[#allocation6 + $0x5d8] sm:$0xff]
    %v965 = vld [vmem:[#allocation6 + $0x5e0] sm:$0xff]
    %v966 = vld [vmem:[#allocation6 + $0x5e8] sm:$0xff]
    %v967 = vld [vmem:[#allocation6 + $0x5f0] sm:$0xff]
    %v968 = vld [vmem:[#allocation6 + $0x5f8] sm:$0xff]
    %v969 = vld [vmem:[#allocation6 + $0x600] sm:$0xff]
    %v970 = vld [vmem:[#allocation6 + $0x608] sm:$0xff]
    %v971 = vld [vmem:[#allocation6 + $0x610] sm:$0xff]
    %v972 = vld [vmem:[#allocation6 + $0x618] sm:$0xff]
    %v973 = vld [vmem:[#allocation6 + $0x620] sm:$0xff]
    %v974 = vld [vmem:[#allocation6 + $0x628] sm:$0xff]
    %v975 = vld [vmem:[#allocation6 + $0x630] sm:$0xff]
    %v976 = vld [vmem:[#allocation6 + $0x638] sm:$0xff]
    %v977 = vld [vmem:[#allocation6 + $0x640] sm:$0xff]
    %v978 = vld [vmem:[#allocation6 + $0x648] sm:$0xff]
    %v979 = vld [vmem:[#allocation6 + $0x650] sm:$0xff]
    %v980 = vld [vmem:[#allocation6 + $0x658] sm:$0xff]
    %v981 = vld [vmem:[#allocation6 + $0x660] sm:$0xff]
    %v982 = vld [vmem:[#allocation6 + $0x668] sm:$0xff]
    %v983 = vld [vmem:[#allocation6 + $0x670] sm:$0xff]
    %v984 = vld [vmem:[#allocation6 + $0x678] sm:$0xff]
    %v985 = vld [vmem:[#allocation6 + $0x680] sm:$0xff]
    %v986 = vld [vmem:[#allocation6 + $0x688] sm:$0xff]
    %v987 = vld [vmem:[#allocation6 + $0x690] sm:$0xff]
    %v988 = vld [vmem:[#allocation6 + $0x698] sm:$0xff]
    %v989 = vld [vmem:[#allocation6 + $0x6a0] sm:$0xff]
    %v990 = vld [vmem:[#allocation6 + $0x6a8] sm:$0xff]
    %v991 = vld [vmem:[#allocation6 + $0x6b0] sm:$0xff]
    %v992 = vld [vmem:[#allocation6 + $0x6b8] sm:$0xff]
    %v993 = vld [vmem:[#allocation6 + $0x6c0] sm:$0xff]
    %v994 = vld [vmem:[#allocation6 + $0x6c8] sm:$0xff]
    %v995 = vld [vmem:[#allocation6 + $0x6d0] sm:$0xff]
    %v996 = vld [vmem:[#allocation6 + $0x6d8] sm:$0xff]
    %v997 = vld [vmem:[#allocation6 + $0x6e0] sm:$0xff]
    %v998 = vld [vmem:[#allocation6 + $0x6e8] sm:$0xff]
    %v999 = vld [vmem:[#allocation6 + $0x6f0] sm:$0xff]
    %v1000 = vld [vmem:[#allocation6 + $0x6f8] sm:$0xff]
    %v1001 = vld [vmem:[#allocation6 + $0x700] sm:$0xff]
    %v1002 = vld [vmem:[#allocation6 + $0x708] sm:$0xff]
    %v1003 = vld [vmem:[#allocation6 + $0x710] sm:$0xff]
    %v1004 = vld [vmem:[#allocation6 + $0x718] sm:$0xff]
    %v1005 = vld [vmem:[#allocation6 + $0x720] sm:$0xff]
    %v1006 = vld [vmem:[#allocation6 + $0x728] sm:$0xff]
    %v1007 = vld [vmem:[#allocation6 + $0x730] sm:$0xff]
    %v1008 = vld [vmem:[#allocation6 + $0x738] sm:$0xff]
    %v1009 = vld [vmem:[#allocation6 + $0x740] sm:$0xff]
    %v1010 = vld [vmem:[#allocation6 + $0x748] sm:$0xff]
    %v1011 = vld [vmem:[#allocation6 + $0x750] sm:$0xff]
    %v1012 = vld [vmem:[#allocation6 + $0x758] sm:$0xff]
    %v1013 = vld [vmem:[#allocation6 + $0x760] sm:$0xff]
    %v1014 = vld [vmem:[#allocation6 + $0x768] sm:$0xff]
    %v1015 = vld [vmem:[#allocation6 + $0x770] sm:$0xff]
    %v1016 = vld [vmem:[#allocation6 + $0x778] sm:$0xff]
    %v1017 = vld [vmem:[#allocation6 + $0x780] sm:$0xff]
    %v1018 = vld [vmem:[#allocation6 + $0x788] sm:$0xff]
    %v1019 = vld [vmem:[#allocation6 + $0x790] sm:$0xff]
    %v1020 = vld [vmem:[#allocation6 + $0x798] sm:$0xff]
    %v1021 = vld [vmem:[#allocation6 + $0x7a0] sm:$0xff]
    %v1022 = vld [vmem:[#allocation6 + $0x7a8] sm:$0xff]
    %v1023 = vld [vmem:[#allocation6 + $0x7b0] sm:$0xff]
    %v1024 = vld [vmem:[#allocation6 + $0x7b8] sm:$0xff]
    %v1025 = vld [vmem:[#allocation6 + $0x7c0] sm:$0xff]
    %v1026 = vld [vmem:[#allocation6 + $0x7c8] sm:$0xff]
    %v1027 = vld [vmem:[#allocation6 + $0x7d0] sm:$0xff]
    %v1028 = vld [vmem:[#allocation6 + $0x7d8] sm:$0xff]
    %v1029 = vld [vmem:[#allocation6 + $0x7e0] sm:$0xff]
    %v1030 = vld [vmem:[#allocation6 + $0x7e8] sm:$0xff]
    %v1031 = vld [vmem:[#allocation6 + $0x7f0] sm:$0xff]
    %v1032 = vld [vmem:[#allocation6 + $0x7f8] sm:$0xff]
    %v1033 = vld [vmem:[#allocation6 + $0x800] sm:$0xff]
    %v1034 = vld [vmem:[#allocation6 + $0x808] sm:$0xff]
    %v1035 = vld [vmem:[#allocation6 + $0x810] sm:$0xff]
    %v1036 = vld [vmem:[#allocation6 + $0x818] sm:$0xff]
    %v1037 = vld [vmem:[#allocation6 + $0x820] sm:$0xff]
    %v1038 = vld [vmem:[#allocation6 + $0x828] sm:$0xff]
    %v1039 = vld [vmem:[#allocation6 + $0x830] sm:$0xff]
    %v1040 = vld [vmem:[#allocation6 + $0x838] sm:$0xff]
    %v1041 = vld [vmem:[#allocation6 + $0x840] sm:$0xff]
    %v1042 = vld [vmem:[#allocation6 + $0x848] sm:$0xff]
    %v1043 = vld [vmem:[#allocation6 + $0x850] sm:$0xff]
    %v1044 = vld [vmem:[#allocation6 + $0x858] sm:$0xff]
    %v1045 = vld [vmem:[#allocation6 + $0x860] sm:$0xff]
    %v1046 = vld [vmem:[#allocation6 + $0x868] sm:$0xff]
    %v1047 = vld [vmem:[#allocation6 + $0x870] sm:$0xff]
    %v1048 = vld [vmem:[#allocation6 + $0x878] sm:$0xff]
    %v1049 = vld [vmem:[#allocation6 + $0x880] sm:$0xff]
    %v1050 = vld [vmem:[#allocation6 + $0x888] sm:$0xff]
    %v1051 = vld [vmem:[#allocation6 + $0x890] sm:$0xff]
    %v1052 = vld [vmem:[#allocation6 + $0x898] sm:$0xff]
    %v1053 = vld [vmem:[#allocation6 + $0x8a0] sm:$0xff]
    %v1054 = vld [vmem:[#allocation6 + $0x8a8] sm:$0xff]
    %v1055 = vld [vmem:[#allocation6 + $0x8b0] sm:$0xff]
    %v1056 = vld [vmem:[#allocation6 + $0x8b8] sm:$0xff]
    %v1057 = vld [vmem:[#allocation6 + $0x8c0] sm:$0xff]
    %v1058 = vld [vmem:[#allocation6 + $0x8c8] sm:$0xff]
    %v1059 = vld [vmem:[#allocation6 + $0x8d0] sm:$0xff]
    %v1060 = vld [vmem:[#allocation6 + $0x8d8] sm:$0xff]
    %v1061 = vld [vmem:[#allocation6 + $0x8e0] sm:$0xff]
    %v1062 = vld [vmem:[#allocation6 + $0x8e8] sm:$0xff]
    %v1063 = vld [vmem:[#allocation6 + $0x8f0] sm:$0xff]
    %v1064 = vld [vmem:[#allocation6 + $0x8f8] sm:$0xff]
    %v1065 = vld [vmem:[#allocation6 + $0x900] sm:$0xff]
    %v1066 = vld [vmem:[#allocation6 + $0x908] sm:$0xff]
    %v1067 = vld [vmem:[#allocation6 + $0x910] sm:$0xff]
    %v1068 = vld [vmem:[#allocation6 + $0x918] sm:$0xff]
    %v1069 = vld [vmem:[#allocation6 + $0x920] sm:$0xff]
    %v1070 = vld [vmem:[#allocation6 + $0x928] sm:$0xff]
    %v1071 = vld [vmem:[#allocation6 + $0x930] sm:$0xff]
    %v1072 = vld [vmem:[#allocation6 + $0x938] sm:$0xff]
    %v1073 = vld [vmem:[#allocation6 + $0x940] sm:$0xff]
    %v1074 = vld [vmem:[#allocation6 + $0x948] sm:$0xff]
    %v1075 = vld [vmem:[#allocation6 + $0x950] sm:$0xff]
    %v1076 = vld [vmem:[#allocation6 + $0x958] sm:$0xff]
    %v1077 = vld [vmem:[#allocation6 + $0x960] sm:$0xff]
    %v1078 = vld [vmem:[#allocation6 + $0x968] sm:$0xff]
    %v1079 = vld [vmem:[#allocation6 + $0x970] sm:$0xff]
    %v1080 = vld [vmem:[#allocation6 + $0x978] sm:$0xff]
    %v1081 = vld [vmem:[#allocation6 + $0x980] sm:$0xff]
    %v1082 = vld [vmem:[#allocation6 + $0x988] sm:$0xff]
    %v1083 = vld [vmem:[#allocation6 + $0x990] sm:$0xff]
    %v1084 = vld [vmem:[#allocation6 + $0x998] sm:$0xff]
    %v1085 = vld [vmem:[#allocation6 + $0x9a0] sm:$0xff]
    %v1086 = vld [vmem:[#allocation6 + $0x9a8] sm:$0xff]
    %v1087 = vld [vmem:[#allocation6 + $0x9b0] sm:$0xff]
    %v1088 = vld [vmem:[#allocation6 + $0x9b8] sm:$0xff]
    %v1089 = vld [vmem:[#allocation6 + $0x9c0] sm:$0xff]
    %v1090 = vld [vmem:[#allocation6 + $0x9c8] sm:$0xff]
    %v1091 = vld [vmem:[#allocation6 + $0x9d0] sm:$0xff]
    %v1092 = vld [vmem:[#allocation6 + $0x9d8] sm:$0xff]
    %v1093 = vld [vmem:[#allocation6 + $0x9e0] sm:$0xff]
    %v1094 = vld [vmem:[#allocation6 + $0x9e8] sm:$0xff]
    %v1095 = vld [vmem:[#allocation6 + $0x9f0] sm:$0xff]
    %v1096 = vld [vmem:[#allocation6 + $0x9f8] sm:$0xff]
    %v1097 = vld [vmem:[#allocation6 + $0xa00] sm:$0xff]
    %v1098 = vld [vmem:[#allocation6 + $0xa08] sm:$0xff]
    %v1099 = vld [vmem:[#allocation6 + $0xa10] sm:$0xff]
    %v1100 = vld [vmem:[#allocation6 + $0xa18] sm:$0xff]
    %v1101 = vld [vmem:[#allocation6 + $0xa20] sm:$0xff]
    %v1102 = vld [vmem:[#allocation6 + $0xa28] sm:$0xff]
    %v1103 = vld [vmem:[#allocation6 + $0xa30] sm:$0xff]
    %v1104 = vld [vmem:[#allocation6 + $0xa38] sm:$0xff]
    %v1105 = vld [vmem:[#allocation6 + $0xa40] sm:$0xff]
    %v1106 = vld [vmem:[#allocation6 + $0xa48] sm:$0xff]
    %v1107 = vld [vmem:[#allocation6 + $0xa50] sm:$0xff]
    %v1108 = vld [vmem:[#allocation6 + $0xa58] sm:$0xff]
    %v1109 = vld [vmem:[#allocation6 + $0xa60] sm:$0xff]
    %v1110 = vld [vmem:[#allocation6 + $0xa68] sm:$0xff]
    %v1111 = vld [vmem:[#allocation6 + $0xa70] sm:$0xff]
    %v1112 = vld [vmem:[#allocation6 + $0xa78] sm:$0xff]
    %v1113 = vld [vmem:[#allocation6 + $0xa80] sm:$0xff]
    %v1114 = vld [vmem:[#allocation6 + $0xa88] sm:$0xff]
    %v1115 = vld [vmem:[#allocation6 + $0xa90] sm:$0xff]
    %v1116 = vld [vmem:[#allocation6 + $0xa98] sm:$0xff]
    %v1117 = vld [vmem:[#allocation6 + $0xaa0] sm:$0xff]
    %v1118 = vld [vmem:[#allocation6 + $0xaa8] sm:$0xff]
    %v1119 = vld [vmem:[#allocation6 + $0xab0] sm:$0xff]
    %v1120 = vld [vmem:[#allocation6 + $0xab8] sm:$0xff]
    %v1121 = vld [vmem:[#allocation6 + $0xac0] sm:$0xff]
    %v1122 = vld [vmem:[#allocation6 + $0xac8] sm:$0xff]
    %v1123 = vld [vmem:[#allocation6 + $0xad0] sm:$0xff]
    %v1124 = vld [vmem:[#allocation6 + $0xad8] sm:$0xff]
    %v1125 = vld [vmem:[#allocation6 + $0xae0] sm:$0xff]
    %v1126 = vld [vmem:[#allocation6 + $0xae8] sm:$0xff]
    %v1127 = vld [vmem:[#allocation6 + $0xaf0] sm:$0xff]
    %v1128 = vld [vmem:[#allocation6 + $0xaf8] sm:$0xff]
    %v1129 = vld [vmem:[#allocation6 + $0xb00] sm:$0xff]
    %v1130 = vld [vmem:[#allocation6 + $0xb08] sm:$0xff]
    %v1131 = vld [vmem:[#allocation6 + $0xb10] sm:$0xff]
    %v1132 = vld [vmem:[#allocation6 + $0xb18] sm:$0xff]
    %v1133 = vld [vmem:[#allocation6 + $0xb20] sm:$0xff]
    %v1134 = vld [vmem:[#allocation6 + $0xb28] sm:$0xff]
    %v1135 = vld [vmem:[#allocation6 + $0xb30] sm:$0xff]
    %v1136 = vld [vmem:[#allocation6 + $0xb38] sm:$0xff]
    %v1137 = vld [vmem:[#allocation6 + $0xb40] sm:$0xff]
    %v1138 = vld [vmem:[#allocation6 + $0xb48] sm:$0xff]
    %v1139 = vld [vmem:[#allocation6 + $0xb50] sm:$0xff]
    %v1140 = vld [vmem:[#allocation6 + $0xb58] sm:$0xff]
    %v1141 = vld [vmem:[#allocation6 + $0xb60] sm:$0xff]
    %v1142 = vld [vmem:[#allocation6 + $0xb68] sm:$0xff]
    %v1143 = vld [vmem:[#allocation6 + $0xb70] sm:$0xff]
    %v1144 = vld [vmem:[#allocation6 + $0xb78] sm:$0xff]
    %v1145 = vld [vmem:[#allocation6 + $0xb80] sm:$0xff]
    %v1146 = vld [vmem:[#allocation6 + $0xb88] sm:$0xff]
    %v1147 = vld [vmem:[#allocation6 + $0xb90] sm:$0xff]
    %v1148 = vld [vmem:[#allocation6 + $0xb98] sm:$0xff]
    %v1149 = vld [vmem:[#allocation6 + $0xba0] sm:$0xff]
    %v1150 = vld [vmem:[#allocation6 + $0xba8] sm:$0xff]
    %v1151 = vld [vmem:[#allocation6 + $0xbb0] sm:$0xff]
    %v1152 = vld [vmem:[#allocation6 + $0xbb8] sm:$0xff]
    %v1153 = vld [vmem:[#allocation6 + $0xbc0] sm:$0xff]
    %v1154 = vld [vmem:[#allocation6 + $0xbc8] sm:$0xff]
    %v1155 = vld [vmem:[#allocation6 + $0xbd0] sm:$0xff]
    %v1156 = vld [vmem:[#allocation6 + $0xbd8] sm:$0xff]
    %v1157 = vld [vmem:[#allocation6 + $0xbe0] sm:$0xff]
    %v1158 = vld [vmem:[#allocation6 + $0xbe8] sm:$0xff]
    %v1159 = vld [vmem:[#allocation6 + $0xbf0] sm:$0xff]
    %v1160 = vld [vmem:[#allocation6 + $0xbf8] sm:$0xff]
    %v1161 = vld [vmem:[#allocation6 + $0xc00] sm:$0xff]
    %v1162 = vld [vmem:[#allocation6 + $0xc08] sm:$0xff]
    %v1163 = vld [vmem:[#allocation6 + $0xc10] sm:$0xff]
    %v1164 = vld [vmem:[#allocation6 + $0xc18] sm:$0xff]
    %v1165 = vld [vmem:[#allocation6 + $0xc20] sm:$0xff]
    %v1166 = vld [vmem:[#allocation6 + $0xc28] sm:$0xff]
    %v1167 = vld [vmem:[#allocation6 + $0xc30] sm:$0xff]
    %v1168 = vld [vmem:[#allocation6 + $0xc38] sm:$0xff]
    %v1169 = vld [vmem:[#allocation6 + $0xc40] sm:$0xff]
    %v1170 = vld [vmem:[#allocation6 + $0xc48] sm:$0xff]
    %v1171 = vld [vmem:[#allocation6 + $0xc50] sm:$0xff]
    %v1172 = vld [vmem:[#allocation6 + $0xc58] sm:$0xff]
    %v1173 = vld [vmem:[#allocation6 + $0xc60] sm:$0xff]
    %v1174 = vld [vmem:[#allocation6 + $0xc68] sm:$0xff]
    %v1175 = vld [vmem:[#allocation6 + $0xc70] sm:$0xff]
    %v1176 = vld [vmem:[#allocation6 + $0xc78] sm:$0xff]
    %v1177 = vld [vmem:[#allocation6 + $0xc80] sm:$0xff]
    %v1178 = vld [vmem:[#allocation6 + $0xc88] sm:$0xff]
    %v1179 = vld [vmem:[#allocation6 + $0xc90] sm:$0xff]
    %v1180 = vld [vmem:[#allocation6 + $0xc98] sm:$0xff]
    %v1181 = vld [vmem:[#allocation6 + $0xca0] sm:$0xff]
    %v1182 = vld [vmem:[#allocation6 + $0xca8] sm:$0xff]
    %v1183 = vld [vmem:[#allocation6 + $0xcb0] sm:$0xff]
    %v1184 = vld [vmem:[#allocation6 + $0xcb8] sm:$0xff]
    %v1185 = vld [vmem:[#allocation6 + $0xcc0] sm:$0xff]
    %v1186 = vld [vmem:[#allocation6 + $0xcc8] sm:$0xff]
    %v1187 = vld [vmem:[#allocation6 + $0xcd0] sm:$0xff]
    %v1188 = vld [vmem:[#allocation6 + $0xcd8] sm:$0xff]
    %v1189 = vld [vmem:[#allocation6 + $0xce0] sm:$0xff]
    %v1190 = vld [vmem:[#allocation6 + $0xce8] sm:$0xff]
    %v1191 = vld [vmem:[#allocation6 + $0xcf0] sm:$0xff]
    %v1192 = vld [vmem:[#allocation6 + $0xcf8] sm:$0xff]
    %v1193 = vld [vmem:[#allocation6 + $0xd00] sm:$0xff]
    %v1194 = vld [vmem:[#allocation6 + $0xd08] sm:$0xff]
    %v1195 = vld [vmem:[#allocation6 + $0xd10] sm:$0xff]
    %v1196 = vld [vmem:[#allocation6 + $0xd18] sm:$0xff]
    %v1197 = vld [vmem:[#allocation6 + $0xd20] sm:$0xff]
    %v1198 = vld [vmem:[#allocation6 + $0xd28] sm:$0xff]
    %v1199 = vld [vmem:[#allocation6 + $0xd30] sm:$0xff]
    %v1200 = vld [vmem:[#allocation6 + $0xd38] sm:$0xff]
    %v1201 = vld [vmem:[#allocation6 + $0xd40] sm:$0xff]
    %v1202 = vld [vmem:[#allocation6 + $0xd48] sm:$0xff]
    %v1203 = vld [vmem:[#allocation6 + $0xd50] sm:$0xff]
    %v1204 = vld [vmem:[#allocation6 + $0xd58] sm:$0xff]
    %v1205 = vld [vmem:[#allocation6 + $0xd60] sm:$0xff]
    %v1206 = vld [vmem:[#allocation6 + $0xd68] sm:$0xff]
    %v1207 = vld [vmem:[#allocation6 + $0xd70] sm:$0xff]
    %v1208 = vld [vmem:[#allocation6 + $0xd78] sm:$0xff]
    %v1209 = vld [vmem:[#allocation6 + $0xd80] sm:$0xff]
    %v1210 = vld [vmem:[#allocation6 + $0xd88] sm:$0xff]
    %v1211 = vld [vmem:[#allocation6 + $0xd90] sm:$0xff]
    %v1212 = vld [vmem:[#allocation6 + $0xd98] sm:$0xff]
    %v1213 = vld [vmem:[#allocation6 + $0xda0] sm:$0xff]
    %v1214 = vld [vmem:[#allocation6 + $0xda8] sm:$0xff]
    %v1215 = vld [vmem:[#allocation6 + $0xdb0] sm:$0xff]
    %v1216 = vld [vmem:[#allocation6 + $0xdb8] sm:$0xff]
    %v1217 = vld [vmem:[#allocation6 + $0xdc0] sm:$0xff]
    %v1218 = vld [vmem:[#allocation6 + $0xdc8] sm:$0xff]
    %v1219 = vld [vmem:[#allocation6 + $0xdd0] sm:$0xff]
    %v1220 = vld [vmem:[#allocation6 + $0xdd8] sm:$0xff]
    %v1221 = vld [vmem:[#allocation6 + $0xde0] sm:$0xff]
    %v1222 = vld [vmem:[#allocation6 + $0xde8] sm:$0xff]
    %v1223 = vld [vmem:[#allocation6 + $0xdf0] sm:$0xff]
    %v1224 = vld [vmem:[#allocation6 + $0xdf8] sm:$0xff]
    %v1225 = vld [vmem:[#allocation6 + $0xe00] sm:$0xff]
    %v1226 = vld [vmem:[#allocation6 + $0xe08] sm:$0xff]
    %v1227 = vld [vmem:[#allocation6 + $0xe10] sm:$0xff]
    %v1228 = vld [vmem:[#allocation6 + $0xe18] sm:$0xff]
    %v1229 = vld [vmem:[#allocation6 + $0xe20] sm:$0xff]
    %v1230 = vld [vmem:[#allocation6 + $0xe28] sm:$0xff]
    %v1231 = vld [vmem:[#allocation6 + $0xe30] sm:$0xff]
    %v1232 = vld [vmem:[#allocation6 + $0xe38] sm:$0xff]
    %v1233 = vld [vmem:[#allocation6 + $0xe40] sm:$0xff]
    %v1234 = vld [vmem:[#allocation6 + $0xe48] sm:$0xff]
    %v1235 = vld [vmem:[#allocation6 + $0xe50] sm:$0xff]
    %v1236 = vld [vmem:[#allocation6 + $0xe58] sm:$0xff]
    %v1237 = vld [vmem:[#allocation6 + $0xe60] sm:$0xff]
    %v1238 = vld [vmem:[#allocation6 + $0xe68] sm:$0xff]
    %v1239 = vld [vmem:[#allocation6 + $0xe70] sm:$0xff]
    %v1240 = vld [vmem:[#allocation6 + $0xe78] sm:$0xff]
    %v1241 = vld [vmem:[#allocation6 + $0xe80] sm:$0xff]
    %v1242 = vld [vmem:[#allocation6 + $0xe88] sm:$0xff]
    %v1243 = vld [vmem:[#allocation6 + $0xe90] sm:$0xff]
    %v1244 = vld [vmem:[#allocation6 + $0xe98] sm:$0xff]
    %v1245 = vld [vmem:[#allocation6 + $0xea0] sm:$0xff]
    %v1246 = vld [vmem:[#allocation6 + $0xea8] sm:$0xff]
    %v1247 = vld [vmem:[#allocation6 + $0xeb0] sm:$0xff]
    %v1248 = vld [vmem:[#allocation6 + $0xeb8] sm:$0xff]
    %v1249 = vld [vmem:[#allocation6 + $0xec0] sm:$0xff]
    %v1250 = vld [vmem:[#allocation6 + $0xec8] sm:$0xff]
    %v1251 = vld [vmem:[#allocation6 + $0xed0] sm:$0xff]
    %v1252 = vld [vmem:[#allocation6 + $0xed8] sm:$0xff]
    %v1253 = vld [vmem:[#allocation6 + $0xee0] sm:$0xff]
    %v1254 = vld [vmem:[#allocation6 + $0xee8] sm:$0xff]
    %v1255 = vld [vmem:[#allocation6 + $0xef0] sm:$0xff]
    %v1256 = vld [vmem:[#allocation6 + $0xef8] sm:$0xff]
    %v1257 = vld [vmem:[#allocation6 + $0xf00] sm:$0xff]
    %v1258 = vld [vmem:[#allocation6 + $0xf08] sm:$0xff]
    %v1259 = vld [vmem:[#allocation6 + $0xf10] sm:$0xff]
    %v1260 = vld [vmem:[#allocation6 + $0xf18] sm:$0xff]
    %v1261 = vld [vmem:[#allocation6 + $0xf20] sm:$0xff]
    %v1262 = vld [vmem:[#allocation6 + $0xf28] sm:$0xff]
    %v1263 = vld [vmem:[#allocation6 + $0xf30] sm:$0xff]
    %v1264 = vld [vmem:[#allocation6 + $0xf38] sm:$0xff]
    %v1265 = vld [vmem:[#allocation6 + $0xf40] sm:$0xff]
    %v1266 = vld [vmem:[#allocation6 + $0xf48] sm:$0xff]
    %v1267 = vld [vmem:[#allocation6 + $0xf50] sm:$0xff]
    %v1268 = vld [vmem:[#allocation6 + $0xf58] sm:$0xff]
    %v1269 = vld [vmem:[#allocation6 + $0xf60] sm:$0xff]
    %v1270 = vld [vmem:[#allocation6 + $0xf68] sm:$0xff]
    %v1271 = vld [vmem:[#allocation6 + $0xf70] sm:$0xff]
    %v1272 = vld [vmem:[#allocation6 + $0xf78] sm:$0xff]
    %v1273 = vld [vmem:[#allocation6 + $0xf80] sm:$0xff]
    %v1274 = vld [vmem:[#allocation6 + $0xf88] sm:$0xff]
    %v1275 = vld [vmem:[#allocation6 + $0xf90] sm:$0xff]
    %v1276 = vld [vmem:[#allocation6 + $0xf98] sm:$0xff]
    %v1277 = vld [vmem:[#allocation6 + $0xfa0] sm:$0xff]
    %v1278 = vld [vmem:[#allocation6 + $0xfa8] sm:$0xff]
    %v1279 = vld [vmem:[#allocation6 + $0xfb0] sm:$0xff]
    %v1280 = vld [vmem:[#allocation6 + $0xfb8] sm:$0xff]
    %v1281 = vld [vmem:[#allocation6 + $0xfc0] sm:$0xff]
    %v1282 = vld [vmem:[#allocation6 + $0xfc8] sm:$0xff]
    %v1283 = vld [vmem:[#allocation6 + $0xfd0] sm:$0xff]
    %v1284 = vld [vmem:[#allocation6 + $0xfd8] sm:$0xff]
    %v1285 = vld [vmem:[#allocation6 + $0xfe0] sm:$0xff]
    %v1286 = vld [vmem:[#allocation6 + $0xfe8] sm:$0xff]
    %v1287 = vld [vmem:[#allocation6 + $0xff0] sm:$0xff]
    %v1288 = vld [vmem:[#allocation6 + $0xff8] sm:$0xff]
    %v1289 = vld [vmem:[#allocation7] sm:$0xf]
    %v1291 = vperm.slane %v1289, 0
    %v1292 = vperm.slane %v1289, 1
    %v1293 = vperm.slane %v1289, 2
    %v1294 = vperm.slane %v1289, 3
    %1299 = vmatpush.msra.mxu0 %v837
    %1300 = vmatpush.msra.mxu0 %v833
    %1301 = vmatpush.msra.mxu0 %v829
    %1302 = vmatpush.msra.mxu0 %v825
    %1303 = vmatpush.msra.mxu0 %v821
    %1304 = vmatpush.msra.mxu0 %v817
    %1305 = vmatpush.msra.mxu0 %v813
    %1306 = vmatpush.msra.mxu0 %v809
    %1307 = vmatpush.msra.mxu0 %v805
    %1308 = vmatpush.msra.mxu0 %v801
    %1309 = vmatpush.msra.mxu0 %v797
    %1310 = vmatpush.msra.mxu0 %v793
    %1311 = vmatpush.msra.mxu0 %v789
    %1312 = vmatpush.msra.mxu0 %v785
    %1313 = vmatpush.msra.mxu0 %v781
    %1314 = vmatpush.msra.mxu0 %v777
    %1315 = vmatmul.f32.gmra.mxu0 %v769
    %v1316 = vpop.f32.mrf.mxu0
    %v1317 = vadd.f32 %v1291, %v1316
    %1318 = vdwg.mxu0
    %1319 = vmatpush.msra.mxu0 %v901
    %1320 = vmatpush.msra.mxu0 %v897
    %1321 = vmatpush.msra.mxu0 %v893
    %1322 = vmatpush.msra.mxu0 %v889
    %1323 = vmatpush.msra.mxu0 %v885
    %1324 = vmatpush.msra.mxu0 %v881
    %1325 = vmatpush.msra.mxu0 %v877
    %1326 = vmatpush.msra.mxu0 %v873
    %1327 = vmatpush.msra.mxu0 %v869
    %1328 = vmatpush.msra.mxu0 %v865
    %1329 = vmatpush.msra.mxu0 %v861
    %1330 = vmatpush.msra.mxu0 %v857
    %1331 = vmatpush.msra.mxu0 %v853
    %1332 = vmatpush.msra.mxu0 %v849
    %1333 = vmatpush.msra.mxu0 %v845
    %1334 = vmatpush.msra.mxu0 %v841
    %1335 = vmatmul.f32.gmra.mxu0 %v770
    %v1336 = vpop.f32.mrf.mxu0
    %v1337 = vadd.f32 %v1317, %v1336
    %1338 = vdwg.mxu0
    %1339 = vmatpush.msra.mxu0 %v965
    %1340 = vmatpush.msra.mxu0 %v961
    %1341 = vmatpush.msra.mxu0 %v957
    %1342 = vmatpush.msra.mxu0 %v953
    %1343 = vmatpush.msra.mxu0 %v949
    %1344 = vmatpush.msra.mxu0 %v945
    %1345 = vmatpush.msra.mxu0 %v941
    %1346 = vmatpush.msra.mxu0 %v937
    %1347 = vmatpush.msra.mxu0 %v933
    %1348 = vmatpush.msra.mxu0 %v929
    %1349 = vmatpush.msra.mxu0 %v925
    %1350 = vmatpush.msra.mxu0 %v921
    %1351 = vmatpush.msra.mxu0 %v917
    %1352 = vmatpush.msra.mxu0 %v913
    %1353 = vmatpush.msra.mxu0 %v909
    %1354 = vmatpush.msra.mxu0 %v905
    %1355 = vmatmul.f32.gmra.mxu0 %v771
    %v1356 = vpop.f32.mrf.mxu0
    %v1357 = vadd.f32 %v1337, %v1356
    %1358 = vdwg.mxu0
    %1359 = vmatpush.msra.mxu0 %v1029
    %1360 = vmatpush.msra.mxu0 %v1025
    %1361 = vmatpush.msra.mxu0 %v1021
    %1362 = vmatpush.msra.mxu0 %v1017
    %1363 = vmatpush.msra.mxu0 %v1013
    %1364 = vmatpush.msra.mxu0 %v1009
    %1365 = vmatpush.msra.mxu0 %v1005
    %1366 = vmatpush.msra.mxu0 %v1001
    %1367 = vmatpush.msra.mxu0 %v997
    %1368 = vmatpush.msra.mxu0 %v993
    %1369 = vmatpush.msra.mxu0 %v989
    %1370 = vmatpush.msra.mxu0 %v985
    %1371 = vmatpush.msra.mxu0 %v981
    %1372 = vmatpush.msra.mxu0 %v977
    %1373 = vmatpush.msra.mxu0 %v973
    %1374 = vmatpush.msra.mxu0 %v969
    %1375 = vmatmul.f32.gmra.mxu0 %v772
    %v1376 = vpop.f32.mrf.mxu0
    %v1377 = vadd.f32 %v1357, %v1376
    %1378 = vdwg.mxu0
    %1379 = vmatpush.msra.mxu0 %v1093
    %1380 = vmatpush.msra.mxu0 %v1089
    %1381 = vmatpush.msra.mxu0 %v1085
    %1382 = vmatpush.msra.mxu0 %v1081
    %1383 = vmatpush.msra.mxu0 %v1077
    %1384 = vmatpush.msra.mxu0 %v1073
    %1385 = vmatpush.msra.mxu0 %v1069
    %1386 = vmatpush.msra.mxu0 %v1065
    %1387 = vmatpush.msra.mxu0 %v1061
    %1388 = vmatpush.msra.mxu0 %v1057
    %1389 = vmatpush.msra.mxu0 %v1053
    %1390 = vmatpush.msra.mxu0 %v1049
    %1391 = vmatpush.msra.mxu0 %v1045
    %1392 = vmatpush.msra.mxu0 %v1041
    %1393 = vmatpush.msra.mxu0 %v1037
    %1394 = vmatpush.msra.mxu0 %v1033
    %1395 = vmatmul.f32.gmra.mxu0 %v773
    %v1396 = vpop.f32.mrf.mxu0
    %v1397 = vadd.f32 %v1377, %v1396
    %1398 = vdwg.mxu0
    %1399 = vmatpush.msra.mxu0 %v1157
    %1400 = vmatpush.msra.mxu0 %v1153
    %1401 = vmatpush.msra.mxu0 %v1149
    %1402 = vmatpush.msra.mxu0 %v1145
    %1403 = vmatpush.msra.mxu0 %v1141
    %1404 = vmatpush.msra.mxu0 %v1137
    %1405 = vmatpush.msra.mxu0 %v1133
    %1406 = vmatpush.msra.mxu0 %v1129
    %1407 = vmatpush.msra.mxu0 %v1125
    %1408 = vmatpush.msra.mxu0 %v1121
    %1409 = vmatpush.msra.mxu0 %v1117
    %1410 = vmatpush.msra.mxu0 %v1113
    %1411 = vmatpush.msra.mxu0 %v1109
    %1412 = vmatpush.msra.mxu0 %v1105
    %1413 = vmatpush.msra.mxu0 %v1101
    %1414 = vmatpush.msra.mxu0 %v1097
    %1415 = vmatmul.f32.gmra.mxu0 %v774
    %v1416 = vpop.f32.mrf.mxu0
    %v1417 = vadd.f32 %v1397, %v1416
    %1418 = vdwg.mxu0
    %1419 = vmatpush.msra.mxu0 %v1221
    %1420 = vmatpush.msra.mxu0 %v1217
    %1421 = vmatpush.msra.mxu0 %v1213
    %1422 = vmatpush.msra.mxu0 %v1209
    %1423 = vmatpush.msra.mxu0 %v1205
    %1424 = vmatpush.msra.mxu0 %v1201
    %1425 = vmatpush.msra.mxu0 %v1197
    %1426 = vmatpush.msra.mxu0 %v1193
    %1427 = vmatpush.msra.mxu0 %v1189
    %1428 = vmatpush.msra.mxu0 %v1185
    %1429 = vmatpush.msra.mxu0 %v1181
    %1430 = vmatpush.msra.mxu0 %v1177
    %1431 = vmatpush.msra.mxu0 %v1173
    %1432 = vmatpush.msra.mxu0 %v1169
    %1433 = vmatpush.msra.mxu0 %v1165
    %1434 = vmatpush.msra.mxu0 %v1161
    %1435 = vmatmul.f32.gmra.mxu0 %v775
    %v1436 = vpop.f32.mrf.mxu0
    %v1437 = vadd.f32 %v1417, %v1436
    %1438 = vdwg.mxu0
    %1439 = vmatpush.msra.mxu0 %v1285
    %1440 = vmatpush.msra.mxu0 %v1281
    %1441 = vmatpush.msra.mxu0 %v1277
    %1442 = vmatpush.msra.mxu0 %v1273
    %1443 = vmatpush.msra.mxu0 %v1269
    %1444 = vmatpush.msra.mxu0 %v1265
    %1445 = vmatpush.msra.mxu0 %v1261
    %1446 = vmatpush.msra.mxu0 %v1257
    %1447 = vmatpush.msra.mxu0 %v1253
    %1448 = vmatpush.msra.mxu0 %v1249
    %1449 = vmatpush.msra.mxu0 %v1245
    %1450 = vmatpush.msra.mxu0 %v1241
    %1451 = vmatpush.msra.mxu0 %v1237
    %1452 = vmatpush.msra.mxu0 %v1233
    %1453 = vmatpush.msra.mxu0 %v1229
    %1454 = vmatpush.msra.mxu0 %v1225
    %1455 = vmatmul.f32.gmra.mxu0 %v776
    %v1456 = vpop.f32.mrf.mxu0
    %v1457 = vadd.f32 %v1437, %v1456
    %1458 = vdwg.mxu0
    %1459 = vmatpush.msra.mxu0 %v838
    %1460 = vmatpush.msra.mxu0 %v834
    %1461 = vmatpush.msra.mxu0 %v830
    %1462 = vmatpush.msra.mxu0 %v826
    %1463 = vmatpush.msra.mxu0 %v822
    %1464 = vmatpush.msra.mxu0 %v818
    %1465 = vmatpush.msra.mxu0 %v814
    %1466 = vmatpush.msra.mxu0 %v810
    %1467 = vmatpush.msra.mxu0 %v806
    %1468 = vmatpush.msra.mxu0 %v802
    %1469 = vmatpush.msra.mxu0 %v798
    %1470 = vmatpush.msra.mxu0 %v794
    %1471 = vmatpush.msra.mxu0 %v790
    %1472 = vmatpush.msra.mxu0 %v786
    %1473 = vmatpush.msra.mxu0 %v782
    %1474 = vmatpush.msra.mxu0 %v778
    %1475 = vmatmul.f32.gmra.mxu0 %v769
    %v1476 = vpop.f32.mrf.mxu0
    %v1477 = vadd.f32 %v1292, %v1476
    %1478 = vdwg.mxu0
    %1479 = vmatpush.msra.mxu0 %v902
    %1480 = vmatpush.msra.mxu0 %v898
    %1481 = vmatpush.msra.mxu0 %v894
    %1482 = vmatpush.msra.mxu0 %v890
    %1483 = vmatpush.msra.mxu0 %v886
    %1484 = vmatpush.msra.mxu0 %v882
    %1485 = vmatpush.msra.mxu0 %v878
    %1486 = vmatpush.msra.mxu0 %v874
    %1487 = vmatpush.msra.mxu0 %v870
    %1488 = vmatpush.msra.mxu0 %v866
    %1489 = vmatpush.msra.mxu0 %v862
    %1490 = vmatpush.msra.mxu0 %v858
    %1491 = vmatpush.msra.mxu0 %v854
    %1492 = vmatpush.msra.mxu0 %v850
    %1493 = vmatpush.msra.mxu0 %v846
    %1494 = vmatpush.msra.mxu0 %v842
    %1495 = vmatmul.f32.gmra.mxu0 %v770
    %v1496 = vpop.f32.mrf.mxu0
    %v1497 = vadd.f32 %v1477, %v1496
    %1498 = vdwg.mxu0
    %1499 = vmatpush.msra.mxu0 %v966
    %1500 = vmatpush.msra.mxu0 %v962
    %1501 = vmatpush.msra.mxu0 %v958
    %1502 = vmatpush.msra.mxu0 %v954
    %1503 = vmatpush.msra.mxu0 %v950
    %1504 = vmatpush.msra.mxu0 %v946
    %1505 = vmatpush.msra.mxu0 %v942
    %1506 = vmatpush.msra.mxu0 %v938
    %1507 = vmatpush.msra.mxu0 %v934
    %1508 = vmatpush.msra.mxu0 %v930
    %1509 = vmatpush.msra.mxu0 %v926
    %1510 = vmatpush.msra.mxu0 %v922
    %1511 = vmatpush.msra.mxu0 %v918
    %1512 = vmatpush.msra.mxu0 %v914
    %1513 = vmatpush.msra.mxu0 %v910
    %1514 = vmatpush.msra.mxu0 %v906
    %1515 = vmatmul.f32.gmra.mxu0 %v771
    %v1516 = vpop.f32.mrf.mxu0
    %v1517 = vadd.f32 %v1497, %v1516
    %1518 = vdwg.mxu0
    %1519 = vmatpush.msra.mxu0 %v1030
    %1520 = vmatpush.msra.mxu0 %v1026
    %1521 = vmatpush.msra.mxu0 %v1022
    %1522 = vmatpush.msra.mxu0 %v1018
    %1523 = vmatpush.msra.mxu0 %v1014
    %1524 = vmatpush.msra.mxu0 %v1010
    %1525 = vmatpush.msra.mxu0 %v1006
    %1526 = vmatpush.msra.mxu0 %v1002
    %1527 = vmatpush.msra.mxu0 %v998
    %1528 = vmatpush.msra.mxu0 %v994
    %1529 = vmatpush.msra.mxu0 %v990
    %1530 = vmatpush.msra.mxu0 %v986
    %1531 = vmatpush.msra.mxu0 %v982
    %1532 = vmatpush.msra.mxu0 %v978
    %1533 = vmatpush.msra.mxu0 %v974
    %1534 = vmatpush.msra.mxu0 %v970
    %1535 = vmatmul.f32.gmra.mxu0 %v772
    %v1536 = vpop.f32.mrf.mxu0
    %v1537 = vadd.f32 %v1517, %v1536
    %1538 = vdwg.mxu0
    %1539 = vmatpush.msra.mxu0 %v1094
    %1540 = vmatpush.msra.mxu0 %v1090
    %1541 = vmatpush.msra.mxu0 %v1086
    %1542 = vmatpush.msra.mxu0 %v1082
    %1543 = vmatpush.msra.mxu0 %v1078
    %1544 = vmatpush.msra.mxu0 %v1074
    %1545 = vmatpush.msra.mxu0 %v1070
    %1546 = vmatpush.msra.mxu0 %v1066
    %1547 = vmatpush.msra.mxu0 %v1062
    %1548 = vmatpush.msra.mxu0 %v1058
    %1549 = vmatpush.msra.mxu0 %v1054
    %1550 = vmatpush.msra.mxu0 %v1050
    %1551 = vmatpush.msra.mxu0 %v1046
    %1552 = vmatpush.msra.mxu0 %v1042
    %1553 = vmatpush.msra.mxu0 %v1038
    %1554 = vmatpush.msra.mxu0 %v1034
    %1555 = vmatmul.f32.gmra.mxu0 %v773
    %v1556 = vpop.f32.mrf.mxu0
    %v1557 = vadd.f32 %v1537, %v1556
    %1558 = vdwg.mxu0
    %1559 = vmatpush.msra.mxu0 %v1158
    %1560 = vmatpush.msra.mxu0 %v1154
    %1561 = vmatpush.msra.mxu0 %v1150
    %1562 = vmatpush.msra.mxu0 %v1146
    %1563 = vmatpush.msra.mxu0 %v1142
    %1564 = vmatpush.msra.mxu0 %v1138
    %1565 = vmatpush.msra.mxu0 %v1134
    %1566 = vmatpush.msra.mxu0 %v1130
    %1567 = vmatpush.msra.mxu0 %v1126
    %1568 = vmatpush.msra.mxu0 %v1122
    %1569 = vmatpush.msra.mxu0 %v1118
    %1570 = vmatpush.msra.mxu0 %v1114
    %1571 = vmatpush.msra.mxu0 %v1110
    %1572 = vmatpush.msra.mxu0 %v1106
    %1573 = vmatpush.msra.mxu0 %v1102
    %1574 = vmatpush.msra.mxu0 %v1098
    %1575 = vmatmul.f32.gmra.mxu0 %v774
    %v1576 = vpop.f32.mrf.mxu0
    %v1577 = vadd.f32 %v1557, %v1576
    %1578 = vdwg.mxu0
    %1579 = vmatpush.msra.mxu0 %v1222
    %1580 = vmatpush.msra.mxu0 %v1218
    %1581 = vmatpush.msra.mxu0 %v1214
    %1582 = vmatpush.msra.mxu0 %v1210
    %1583 = vmatpush.msra.mxu0 %v1206
    %1584 = vmatpush.msra.mxu0 %v1202
    %1585 = vmatpush.msra.mxu0 %v1198
    %1586 = vmatpush.msra.mxu0 %v1194
    %1587 = vmatpush.msra.mxu0 %v1190
    %1588 = vmatpush.msra.mxu0 %v1186
    %1589 = vmatpush.msra.mxu0 %v1182
    %1590 = vmatpush.msra.mxu0 %v1178
    %1591 = vmatpush.msra.mxu0 %v1174
    %1592 = vmatpush.msra.mxu0 %v1170
    %1593 = vmatpush.msra.mxu0 %v1166
    %1594 = vmatpush.msra.mxu0 %v1162
    %1595 = vmatmul.f32.gmra.mxu0 %v775
    %v1596 = vpop.f32.mrf.mxu0
    %v1597 = vadd.f32 %v1577, %v1596
    %1598 = vdwg.mxu0
    %1599 = vmatpush.msra.mxu0 %v1286
    %1600 = vmatpush.msra.mxu0 %v1282
    %1601 = vmatpush.msra.mxu0 %v1278
    %1602 = vmatpush.msra.mxu0 %v1274
    %1603 = vmatpush.msra.mxu0 %v1270
    %1604 = vmatpush.msra.mxu0 %v1266
    %1605 = vmatpush.msra.mxu0 %v1262
    %1606 = vmatpush.msra.mxu0 %v1258
    %1607 = vmatpush.msra.mxu0 %v1254
    %1608 = vmatpush.msra.mxu0 %v1250
    %1609 = vmatpush.msra.mxu0 %v1246
    %1610 = vmatpush.msra.mxu0 %v1242
    %1611 = vmatpush.msra.mxu0 %v1238
    %1612 = vmatpush.msra.mxu0 %v1234
    %1613 = vmatpush.msra.mxu0 %v1230
    %1614 = vmatpush.msra.mxu0 %v1226
    %1615 = vmatmul.f32.gmra.mxu0 %v776
    %v1616 = vpop.f32.mrf.mxu0
    %v1617 = vadd.f32 %v1597, %v1616
    %1618 = vdwg.mxu0
    %1619 = vmatpush.msra.mxu0 %v839
    %1620 = vmatpush.msra.mxu0 %v835
    %1621 = vmatpush.msra.mxu0 %v831
    %1622 = vmatpush.msra.mxu0 %v827
    %1623 = vmatpush.msra.mxu0 %v823
    %1624 = vmatpush.msra.mxu0 %v819
    %1625 = vmatpush.msra.mxu0 %v815
    %1626 = vmatpush.msra.mxu0 %v811
    %1627 = vmatpush.msra.mxu0 %v807
    %1628 = vmatpush.msra.mxu0 %v803
    %1629 = vmatpush.msra.mxu0 %v799
    %1630 = vmatpush.msra.mxu0 %v795
    %1631 = vmatpush.msra.mxu0 %v791
    %1632 = vmatpush.msra.mxu0 %v787
    %1633 = vmatpush.msra.mxu0 %v783
    %1634 = vmatpush.msra.mxu0 %v779
    %1635 = vmatmul.f32.gmra.mxu0 %v769
    %v1636 = vpop.f32.mrf.mxu0
    %v1637 = vadd.f32 %v1293, %v1636
    %1638 = vdwg.mxu0
    %1639 = vmatpush.msra.mxu0 %v903
    %1640 = vmatpush.msra.mxu0 %v899
    %1641 = vmatpush.msra.mxu0 %v895
    %1642 = vmatpush.msra.mxu0 %v891
    %1643 = vmatpush.msra.mxu0 %v887
    %1644 = vmatpush.msra.mxu0 %v883
    %1645 = vmatpush.msra.mxu0 %v879
    %1646 = vmatpush.msra.mxu0 %v875
    %1647 = vmatpush.msra.mxu0 %v871
    %1648 = vmatpush.msra.mxu0 %v867
    %1649 = vmatpush.msra.mxu0 %v863
    %1650 = vmatpush.msra.mxu0 %v859
    %1651 = vmatpush.msra.mxu0 %v855
    %1652 = vmatpush.msra.mxu0 %v851
    %1653 = vmatpush.msra.mxu0 %v847
    %1654 = vmatpush.msra.mxu0 %v843
    %1655 = vmatmul.f32.gmra.mxu0 %v770
    %v1656 = vpop.f32.mrf.mxu0
    %v1657 = vadd.f32 %v1637, %v1656
    %1658 = vdwg.mxu0
    %1659 = vmatpush.msra.mxu0 %v967
    %1660 = vmatpush.msra.mxu0 %v963
    %1661 = vmatpush.msra.mxu0 %v959
    %1662 = vmatpush.msra.mxu0 %v955
    %1663 = vmatpush.msra.mxu0 %v951
    %1664 = vmatpush.msra.mxu0 %v947
    %1665 = vmatpush.msra.mxu0 %v943
    %1666 = vmatpush.msra.mxu0 %v939
    %1667 = vmatpush.msra.mxu0 %v935
    %1668 = vmatpush.msra.mxu0 %v931
    %1669 = vmatpush.msra.mxu0 %v927
    %1670 = vmatpush.msra.mxu0 %v923
    %1671 = vmatpush.msra.mxu0 %v919
    %1672 = vmatpush.msra.mxu0 %v915
    %1673 = vmatpush.msra.mxu0 %v911
    %1674 = vmatpush.msra.mxu0 %v907
    %1675 = vmatmul.f32.gmra.mxu0 %v771
    %v1676 = vpop.f32.mrf.mxu0
    %v1677 = vadd.f32 %v1657, %v1676
    %1678 = vdwg.mxu0
    %1679 = vmatpush.msra.mxu0 %v1031
    %1680 = vmatpush.msra.mxu0 %v1027
    %1681 = vmatpush.msra.mxu0 %v1023
    %1682 = vmatpush.msra.mxu0 %v1019
    %1683 = vmatpush.msra.mxu0 %v1015
    %1684 = vmatpush.msra.mxu0 %v1011
    %1685 = vmatpush.msra.mxu0 %v1007
    %1686 = vmatpush.msra.mxu0 %v1003
    %1687 = vmatpush.msra.mxu0 %v999
    %1688 = vmatpush.msra.mxu0 %v995
    %1689 = vmatpush.msra.mxu0 %v991
    %1690 = vmatpush.msra.mxu0 %v987
    %1691 = vmatpush.msra.mxu0 %v983
    %1692 = vmatpush.msra.mxu0 %v979
    %1693 = vmatpush.msra.mxu0 %v975
    %1694 = vmatpush.msra.mxu0 %v971
    %1695 = vmatmul.f32.gmra.mxu0 %v772
    %v1696 = vpop.f32.mrf.mxu0
    %v1697 = vadd.f32 %v1677, %v1696
    %1698 = vdwg.mxu0
    %1699 = vmatpush.msra.mxu0 %v1095
    %1700 = vmatpush.msra.mxu0 %v1091
    %1701 = vmatpush.msra.mxu0 %v1087
    %1702 = vmatpush.msra.mxu0 %v1083
    %1703 = vmatpush.msra.mxu0 %v1079
    %1704 = vmatpush.msra.mxu0 %v1075
    %1705 = vmatpush.msra.mxu0 %v1071
    %1706 = vmatpush.msra.mxu0 %v1067
    %1707 = vmatpush.msra.mxu0 %v1063
    %1708 = vmatpush.msra.mxu0 %v1059
    %1709 = vmatpush.msra.mxu0 %v1055
    %1710 = vmatpush.msra.mxu0 %v1051
    %1711 = vmatpush.msra.mxu0 %v1047
    %1712 = vmatpush.msra.mxu0 %v1043
    %1713 = vmatpush.msra.mxu0 %v1039
    %1714 = vmatpush.msra.mxu0 %v1035
    %1715 = vmatmul.f32.gmra.mxu0 %v773
    %v1716 = vpop.f32.mrf.mxu0
    %v1717 = vadd.f32 %v1697, %v1716
    %1718 = vdwg.mxu0
    %1719 = vmatpush.msra.mxu0 %v1159
    %1720 = vmatpush.msra.mxu0 %v1155
    %1721 = vmatpush.msra.mxu0 %v1151
    %1722 = vmatpush.msra.mxu0 %v1147
    %1723 = vmatpush.msra.mxu0 %v1143
    %1724 = vmatpush.msra.mxu0 %v1139
    %1725 = vmatpush.msra.mxu0 %v1135
    %1726 = vmatpush.msra.mxu0 %v1131
    %1727 = vmatpush.msra.mxu0 %v1127
    %1728 = vmatpush.msra.mxu0 %v1123
    %1729 = vmatpush.msra.mxu0 %v1119
    %1730 = vmatpush.msra.mxu0 %v1115
    %1731 = vmatpush.msra.mxu0 %v1111
    %1732 = vmatpush.msra.mxu0 %v1107
    %1733 = vmatpush.msra.mxu0 %v1103
    %1734 = vmatpush.msra.mxu0 %v1099
    %1735 = vmatmul.f32.gmra.mxu0 %v774
    %v1736 = vpop.f32.mrf.mxu0
    %v1737 = vadd.f32 %v1717, %v1736
    %1738 = vdwg.mxu0
    %1739 = vmatpush.msra.mxu0 %v1223
    %1740 = vmatpush.msra.mxu0 %v1219
    %1741 = vmatpush.msra.mxu0 %v1215
    %1742 = vmatpush.msra.mxu0 %v1211
    %1743 = vmatpush.msra.mxu0 %v1207
    %1744 = vmatpush.msra.mxu0 %v1203
    %1745 = vmatpush.msra.mxu0 %v1199
    %1746 = vmatpush.msra.mxu0 %v1195
    %1747 = vmatpush.msra.mxu0 %v1191
    %1748 = vmatpush.msra.mxu0 %v1187
    %1749 = vmatpush.msra.mxu0 %v1183
    %1750 = vmatpush.msra.mxu0 %v1179
    %1751 = vmatpush.msra.mxu0 %v1175
    %1752 = vmatpush.msra.mxu0 %v1171
    %1753 = vmatpush.msra.mxu0 %v1167
    %1754 = vmatpush.msra.mxu0 %v1163
    %1755 = vmatmul.f32.gmra.mxu0 %v775
    %v1756 = vpop.f32.mrf.mxu0
    %v1757 = vadd.f32 %v1737, %v1756
    %1758 = vdwg.mxu0
    %1759 = vmatpush.msra.mxu0 %v1287
    %1760 = vmatpush.msra.mxu0 %v1283
    %1761 = vmatpush.msra.mxu0 %v1279
    %1762 = vmatpush.msra.mxu0 %v1275
    %1763 = vmatpush.msra.mxu0 %v1271
    %1764 = vmatpush.msra.mxu0 %v1267
    %1765 = vmatpush.msra.mxu0 %v1263
    %1766 = vmatpush.msra.mxu0 %v1259
    %1767 = vmatpush.msra.mxu0 %v1255
    %1768 = vmatpush.msra.mxu0 %v1251
    %1769 = vmatpush.msra.mxu0 %v1247
    %1770 = vmatpush.msra.mxu0 %v1243
    %1771 = vmatpush.msra.mxu0 %v1239
    %1772 = vmatpush.msra.mxu0 %v1235
    %1773 = vmatpush.msra.mxu0 %v1231
    %1774 = vmatpush.msra.mxu0 %v1227
    %1775 = vmatmul.f32.gmra.mxu0 %v776
    %v1776 = vpop.f32.mrf.mxu0
    %v1777 = vadd.f32 %v1757, %v1776
    %1778 = vdwg.mxu0
    %1779 = vmatpush.msra.mxu0 %v840
    %1780 = vmatpush.msra.mxu0 %v836
    %1781 = vmatpush.msra.mxu0 %v832
    %1782 = vmatpush.msra.mxu0 %v828
    %1783 = vmatpush.msra.mxu0 %v824
    %1784 = vmatpush.msra.mxu0 %v820
    %1785 = vmatpush.msra.mxu0 %v816
    %1786 = vmatpush.msra.mxu0 %v812
    %1787 = vmatpush.msra.mxu0 %v808
    %1788 = vmatpush.msra.mxu0 %v804
    %1789 = vmatpush.msra.mxu0 %v800
    %1790 = vmatpush.msra.mxu0 %v796
    %1791 = vmatpush.msra.mxu0 %v792
    %1792 = vmatpush.msra.mxu0 %v788
    %1793 = vmatpush.msra.mxu0 %v784
    %1794 = vmatpush.msra.mxu0 %v780
    %1795 = vmatmul.f32.gmra.mxu0 %v769
    %v1796 = vpop.f32.mrf.mxu0
    %v1797 = vadd.f32 %v1294, %v1796
    %1798 = vdwg.mxu0
    %1799 = vmatpush.msra.mxu0 %v904
    %1800 = vmatpush.msra.mxu0 %v900
    %1801 = vmatpush.msra.mxu0 %v896
    %1802 = vmatpush.msra.mxu0 %v892
    %1803 = vmatpush.msra.mxu0 %v888
    %1804 = vmatpush.msra.mxu0 %v884
    %1805 = vmatpush.msra.mxu0 %v880
    %1806 = vmatpush.msra.mxu0 %v876
    %1807 = vmatpush.msra.mxu0 %v872
    %1808 = vmatpush.msra.mxu0 %v868
    %1809 = vmatpush.msra.mxu0 %v864
    %1810 = vmatpush.msra.mxu0 %v860
    %1811 = vmatpush.msra.mxu0 %v856
    %1812 = vmatpush.msra.mxu0 %v852
    %1813 = vmatpush.msra.mxu0 %v848
    %1814 = vmatpush.msra.mxu0 %v844
    %1815 = vmatmul.f32.gmra.mxu0 %v770
    %v1816 = vpop.f32.mrf.mxu0
    %v1817 = vadd.f32 %v1797, %v1816
    %1818 = vdwg.mxu0
    %1819 = vmatpush.msra.mxu0 %v968
    %1820 = vmatpush.msra.mxu0 %v964
    %1821 = vmatpush.msra.mxu0 %v960
    %1822 = vmatpush.msra.mxu0 %v956
    %1823 = vmatpush.msra.mxu0 %v952
    %1824 = vmatpush.msra.mxu0 %v948
    %1825 = vmatpush.msra.mxu0 %v944
    %1826 = vmatpush.msra.mxu0 %v940
    %1827 = vmatpush.msra.mxu0 %v936
    %1828 = vmatpush.msra.mxu0 %v932
    %1829 = vmatpush.msra.mxu0 %v928
    %1830 = vmatpush.msra.mxu0 %v924
    %1831 = vmatpush.msra.mxu0 %v920
    %1832 = vmatpush.msra.mxu0 %v916
    %1833 = vmatpush.msra.mxu0 %v912
    %1834 = vmatpush.msra.mxu0 %v908
    %1835 = vmatmul.f32.gmra.mxu0 %v771
    %v1836 = vpop.f32.mrf.mxu0
    %v1837 = vadd.f32 %v1817, %v1836
    %1838 = vdwg.mxu0
    %1839 = vmatpush.msra.mxu0 %v1032
    %1840 = vmatpush.msra.mxu0 %v1028
    %1841 = vmatpush.msra.mxu0 %v1024
    %1842 = vmatpush.msra.mxu0 %v1020
    %1843 = vmatpush.msra.mxu0 %v1016
    %1844 = vmatpush.msra.mxu0 %v1012
    %1845 = vmatpush.msra.mxu0 %v1008
    %1846 = vmatpush.msra.mxu0 %v1004
    %1847 = vmatpush.msra.mxu0 %v1000
    %1848 = vmatpush.msra.mxu0 %v996
    %1849 = vmatpush.msra.mxu0 %v992
    %1850 = vmatpush.msra.mxu0 %v988
    %1851 = vmatpush.msra.mxu0 %v984
    %1852 = vmatpush.msra.mxu0 %v980
    %1853 = vmatpush.msra.mxu0 %v976
    %1854 = vmatpush.msra.mxu0 %v972
    %1855 = vmatmul.f32.gmra.mxu0 %v772
    %v1856 = vpop.f32.mrf.mxu0
    %v1857 = vadd.f32 %v1837, %v1856
    %1858 = vdwg.mxu0
    %1859 = vmatpush.msra.mxu0 %v1096
    %1860 = vmatpush.msra.mxu0 %v1092
    %1861 = vmatpush.msra.mxu0 %v1088
    %1862 = vmatpush.msra.mxu0 %v1084
    %1863 = vmatpush.msra.mxu0 %v1080
    %1864 = vmatpush.msra.mxu0 %v1076
    %1865 = vmatpush.msra.mxu0 %v1072
    %1866 = vmatpush.msra.mxu0 %v1068
    %1867 = vmatpush.msra.mxu0 %v1064
    %1868 = vmatpush.msra.mxu0 %v1060
    %1869 = vmatpush.msra.mxu0 %v1056
    %1870 = vmatpush.msra.mxu0 %v1052
    %1871 = vmatpush.msra.mxu0 %v1048
    %1872 = vmatpush.msra.mxu0 %v1044
    %1873 = vmatpush.msra.mxu0 %v1040
    %1874 = vmatpush.msra.mxu0 %v1036
    %1875 = vmatmul.f32.gmra.mxu0 %v773
    %v1876 = vpop.f32.mrf.mxu0
    %v1877 = vadd.f32 %v1857, %v1876
    %1878 = vdwg.mxu0
    %1879 = vmatpush.msra.mxu0 %v1160
    %1880 = vmatpush.msra.mxu0 %v1156
    %1881 = vmatpush.msra.mxu0 %v1152
    %1882 = vmatpush.msra.mxu0 %v1148
    %1883 = vmatpush.msra.mxu0 %v1144
    %1884 = vmatpush.msra.mxu0 %v1140
    %1885 = vmatpush.msra.mxu0 %v1136
    %1886 = vmatpush.msra.mxu0 %v1132
    %1887 = vmatpush.msra.mxu0 %v1128
    %1888 = vmatpush.msra.mxu0 %v1124
    %1889 = vmatpush.msra.mxu0 %v1120
    %1890 = vmatpush.msra.mxu0 %v1116
    %1891 = vmatpush.msra.mxu0 %v1112
    %1892 = vmatpush.msra.mxu0 %v1108
    %1893 = vmatpush.msra.mxu0 %v1104
    %1894 = vmatpush.msra.mxu0 %v1100
    %1895 = vmatmul.f32.gmra.mxu0 %v774
    %v1896 = vpop.f32.mrf.mxu0
    %v1897 = vadd.f32 %v1877, %v1896
    %1898 = vdwg.mxu0
    %1899 = vmatpush.msra.mxu0 %v1224
    %1900 = vmatpush.msra.mxu0 %v1220
    %1901 = vmatpush.msra.mxu0 %v1216
    %1902 = vmatpush.msra.mxu0 %v1212
    %1903 = vmatpush.msra.mxu0 %v1208
    %1904 = vmatpush.msra.mxu0 %v1204
    %1905 = vmatpush.msra.mxu0 %v1200
    %1906 = vmatpush.msra.mxu0 %v1196
    %1907 = vmatpush.msra.mxu0 %v1192
    %1908 = vmatpush.msra.mxu0 %v1188
    %1909 = vmatpush.msra.mxu0 %v1184
    %1910 = vmatpush.msra.mxu0 %v1180
    %1911 = vmatpush.msra.mxu0 %v1176
    %1912 = vmatpush.msra.mxu0 %v1172
    %1913 = vmatpush.msra.mxu0 %v1168
    %1914 = vmatpush.msra.mxu0 %v1164
    %1915 = vmatmul.f32.gmra.mxu0 %v775
    %v1916 = vpop.f32.mrf.mxu0
    %v1917 = vadd.f32 %v1897, %v1916
    %1918 = vdwg.mxu0
    %1919 = vmatpush.msra.mxu0 %v1288
    %1920 = vmatpush.msra.mxu0 %v1284
    %1921 = vmatpush.msra.mxu0 %v1280
    %1922 = vmatpush.msra.mxu0 %v1276
    %1923 = vmatpush.msra.mxu0 %v1272
    %1924 = vmatpush.msra.mxu0 %v1268
    %1925 = vmatpush.msra.mxu0 %v1264
    %1926 = vmatpush.msra.mxu0 %v1260
    %1927 = vmatpush.msra.mxu0 %v1256
    %1928 = vmatpush.msra.mxu0 %v1252
    %1929 = vmatpush.msra.mxu0 %v1248
    %1930 = vmatpush.msra.mxu0 %v1244
    %1931 = vmatpush.msra.mxu0 %v1240
    %1932 = vmatpush.msra.mxu0 %v1236
    %1933 = vmatpush.msra.mxu0 %v1232
    %1934 = vmatpush.msra.mxu0 %v1228
    %1935 = vmatmul.f32.gmra.mxu0 %v776
    %v1936 = vpop.f32.mrf.mxu0
    %v1937 = vadd.f32 %v1917, %v1936
    %1938 = vdwg.mxu0
    %v1939 = vmax.f32 %v1457, 0.0
    %v1940 = vmax.f32 %v1617, 0.0
    %v1941 = vmax.f32 %v1777, 0.0
    %v1942 = vmax.f32 %v1937, 0.0
    %v1943 = vld [vmem:[%s5] sm:$0xff]
    %v1944 = vld [vmem:[%s5 + $0x8] sm:$0xff]
    %v1945 = vld [vmem:[%s5 + $0x10] sm:$0xff]
    %v1946 = vld [vmem:[%s5 + $0x18] sm:$0xff]
    %v1947 = vld [vmem:[%s5 + $0x20] sm:$0xff]
    %v1948 = vld [vmem:[%s5 + $0x28] sm:$0xff]
    %v1949 = vld [vmem:[%s5 + $0x30] sm:$0xff]
    %v1950 = vld [vmem:[%s5 + $0x38] sm:$0xff]
    %v1951 = vld [vmem:[%s5 + $0x40] sm:$0xff]
    %v1952 = vld [vmem:[%s5 + $0x48] sm:$0xff]
    %v1953 = vld [vmem:[%s5 + $0x50] sm:$0xff]
    %v1954 = vld [vmem:[%s5 + $0x58] sm:$0xff]
    %v1955 = vld [vmem:[%s5 + $0x60] sm:$0xff]
    %v1956 = vld [vmem:[%s5 + $0x68] sm:$0xff]
    %v1957 = vld [vmem:[%s5 + $0x70] sm:$0xff]
    %v1958 = vld [vmem:[%s5 + $0x78] sm:$0xff]
    %v1959 = vld [vmem:[%s5 + $0x80] sm:$0xff]
    %v1960 = vld [vmem:[%s5 + $0x88] sm:$0xff]
    %v1961 = vld [vmem:[%s5 + $0x90] sm:$0xff]
    %v1962 = vld [vmem:[%s5 + $0x98] sm:$0xff]
    %v1963 = vld [vmem:[%s5 + $0xa0] sm:$0xff]
    %v1964 = vld [vmem:[%s5 + $0xa8] sm:$0xff]
    %v1965 = vld [vmem:[%s5 + $0xb0] sm:$0xff]
    %v1966 = vld [vmem:[%s5 + $0xb8] sm:$0xff]
    %v1967 = vld [vmem:[%s5 + $0xc0] sm:$0xff]
    %v1968 = vld [vmem:[%s5 + $0xc8] sm:$0xff]
    %v1969 = vld [vmem:[%s5 + $0xd0] sm:$0xff]
    %v1970 = vld [vmem:[%s5 + $0xd8] sm:$0xff]
    %v1971 = vld [vmem:[%s5 + $0xe0] sm:$0xff]
    %v1972 = vld [vmem:[%s5 + $0xe8] sm:$0xff]
    %v1973 = vld [vmem:[%s5 + $0xf0] sm:$0xff]
    %v1974 = vld [vmem:[%s5 + $0xf8] sm:$0xff]
    %v1975 = vld [vmem:[%s5 + $0x100] sm:$0xff]
    %v1976 = vld [vmem:[%s5 + $0x108] sm:$0xff]
    %v1977 = vld [vmem:[%s5 + $0x110] sm:$0xff]
    %v1978 = vld [vmem:[%s5 + $0x118] sm:$0xff]
    %v1979 = vld [vmem:[%s5 + $0x120] sm:$0xff]
    %v1980 = vld [vmem:[%s5 + $0x128] sm:$0xff]
    %v1981 = vld [vmem:[%s5 + $0x130] sm:$0xff]
    %v1982 = vld [vmem:[%s5 + $0x138] sm:$0xff]
    %v1983 = vld [vmem:[%s5 + $0x140] sm:$0xff]
    %v1984 = vld [vmem:[%s5 + $0x148] sm:$0xff]
    %v1985 = vld [vmem:[%s5 + $0x150] sm:$0xff]
    %v1986 = vld [vmem:[%s5 + $0x158] sm:$0xff]
    %v1987 = vld [vmem:[%s5 + $0x160] sm:$0xff]
    %v1988 = vld [vmem:[%s5 + $0x168] sm:$0xff]
    %v1989 = vld [vmem:[%s5 + $0x170] sm:$0xff]
    %v1990 = vld [vmem:[%s5 + $0x178] sm:$0xff]
    %v1991 = vld [vmem:[%s5 + $0x180] sm:$0xff]
    %v1992 = vld [vmem:[%s5 + $0x188] sm:$0xff]
    %v1993 = vld [vmem:[%s5 + $0x190] sm:$0xff]
    %v1994 = vld [vmem:[%s5 + $0x198] sm:$0xff]
    %v1995 = vld [vmem:[%s5 + $0x1a0] sm:$0xff]
    %v1996 = vld [vmem:[%s5 + $0x1a8] sm:$0xff]
    %v1997 = vld [vmem:[%s5 + $0x1b0] sm:$0xff]
    %v1998 = vld [vmem:[%s5 + $0x1b8] sm:$0xff]
    %v1999 = vld [vmem:[%s5 + $0x1c0] sm:$0xff]
    %v2000 = vld [vmem:[%s5 + $0x1c8] sm:$0xff]
    %v2001 = vld [vmem:[%s5 + $0x1d0] sm:$0xff]
    %v2002 = vld [vmem:[%s5 + $0x1d8] sm:$0xff]
    %v2003 = vld [vmem:[%s5 + $0x1e0] sm:$0xff]
    %v2004 = vld [vmem:[%s5 + $0x1e8] sm:$0xff]
    %v2005 = vld [vmem:[%s5 + $0x1f0] sm:$0xff]
    %v2006 = vld [vmem:[%s5 + $0x1f8] sm:$0xff]
    %v2007 = vld [vmem:[#allocation9] sm:$0x1]
    %v2009 = vperm.slane %v2007, 0
    %2011 = vmatpush.msra.mxu0 %v1958
    %2012 = vmatpush.msra.mxu0 %v1957
    %2013 = vmatpush.msra.mxu0 %v1956
    %2014 = vmatpush.msra.mxu0 %v1955
    %2015 = vmatpush.msra.mxu0 %v1954
    %2016 = vmatpush.msra.mxu0 %v1953
    %2017 = vmatpush.msra.mxu0 %v1952
    %2018 = vmatpush.msra.mxu0 %v1951
    %2019 = vmatpush.msra.mxu0 %v1950
    %2020 = vmatpush.msra.mxu0 %v1949
    %2021 = vmatpush.msra.mxu0 %v1948
    %2022 = vmatpush.msra.mxu0 %v1947
    %2023 = vmatpush.msra.mxu0 %v1946
    %2024 = vmatpush.msra.mxu0 %v1945
    %2025 = vmatpush.msra.mxu0 %v1944
    %2026 = vmatpush.msra.mxu0 %v1943
    %2027 = vmatmul.f32.gmra.mxu0 %v1939
    %v2028 = vpop.f32.mrf.mxu0
    %v2029 = vadd.f32 %v2009, %v2028
    %2030 = vdwg.mxu0
    %2031 = vmatpush.msra.mxu0 %v1974
    %2032 = vmatpush.msra.mxu0 %v1973
    %2033 = vmatpush.msra.mxu0 %v1972
    %2034 = vmatpush.msra.mxu0 %v1971
    %2035 = vmatpush.msra.mxu0 %v1970
    %2036 = vmatpush.msra.mxu0 %v1969
    %2037 = vmatpush.msra.mxu0 %v1968
    %2038 = vmatpush.msra.mxu0 %v1967
    %2039 = vmatpush.msra.mxu0 %v1966
    %2040 = vmatpush.msra.mxu0 %v1965
    %2041 = vmatpush.msra.mxu0 %v1964
    %2042 = vmatpush.msra.mxu0 %v1963
    %2043 = vmatpush.msra.mxu0 %v1962
    %2044 = vmatpush.msra.mxu0 %v1961
    %2045 = vmatpush.msra.mxu0 %v1960
    %2046 = vmatpush.msra.mxu0 %v1959
    %2047 = vmatmul.f32.gmra.mxu0 %v1940
    %v2048 = vpop.f32.mrf.mxu0
    %v2049 = vadd.f32 %v2029, %v2048
    %2050 = vdwg.mxu0
    %2051 = vmatpush.msra.mxu0 %v1990
    %2052 = vmatpush.msra.mxu0 %v1989
    %2053 = vmatpush.msra.mxu0 %v1988
    %2054 = vmatpush.msra.mxu0 %v1987
    %2055 = vmatpush.msra.mxu0 %v1986
    %2056 = vmatpush.msra.mxu0 %v1985
    %2057 = vmatpush.msra.mxu0 %v1984
    %2058 = vmatpush.msra.mxu0 %v1983
    %2059 = vmatpush.msra.mxu0 %v1982
    %2060 = vmatpush.msra.mxu0 %v1981
    %2061 = vmatpush.msra.mxu0 %v1980
    %2062 = vmatpush.msra.mxu0 %v1979
    %2063 = vmatpush.msra.mxu0 %v1978
    %2064 = vmatpush.msra.mxu0 %v1977
    %2065 = vmatpush.msra.mxu0 %v1976
    %2066 = vmatpush.msra.mxu0 %v1975
    %2067 = vmatmul.f32.gmra.mxu0 %v1941
    %v2068 = vpop.f32.mrf.mxu0
    %v2069 = vadd.f32 %v2049, %v2068
    %2070 = vdwg.mxu0
    %2071 = vmatpush.msra.mxu0 %v2006
    %2072 = vmatpush.msra.mxu0 %v2005
    %2073 = vmatpush.msra.mxu0 %v2004
    %2074 = vmatpush.msra.mxu0 %v2003
    %2075 = vmatpush.msra.mxu0 %v2002
    %2076 = vmatpush.msra.mxu0 %v2001
    %2077 = vmatpush.msra.mxu0 %v2000
    %2078 = vmatpush.msra.mxu0 %v1999
    %2079 = vmatpush.msra.mxu0 %v1998
    %2080 = vmatpush.msra.mxu0 %v1997
    %2081 = vmatpush.msra.mxu0 %v1996
    %2082 = vmatpush.msra.mxu0 %v1995
    %2083 = vmatpush.msra.mxu0 %v1994
    %2084 = vmatpush.msra.mxu0 %v1993
    %2085 = vmatpush.msra.mxu0 %v1992
    %2086 = vmatpush.msra.mxu0 %v1991
    %2087 = vmatmul.f32.gmra.mxu0 %v1942
    %v2088 = vpop.f32.mrf.mxu0
    %v2089 = vadd.f32 %v2069, %v2088
    %2090 = vdwg.mxu0
    %v2091 = vmax.f32 %v2089, 0.0
    %v2092 = vld [vmem:[#allocation10] sm:$0xff]
    %v2093 = vld [vmem:[#allocation10 + $0x8] sm:$0xff]
    %v2094 = vld [vmem:[#allocation12] sm:$0x1]
    %v2096 = vperm.slane %v2094, 0
    %vm2098 = vcmask 130048
    %v2100 = vsel %vm2098, %v2091, 0
    %2102 = vmatpush.msra.mxu0 0.0
    %2103 = vmatpush.msra.mxu0 0.0
    %2104 = vmatpush.msra.mxu0 0.0
    %2105 = vmatpush.msra.mxu0 0.0
    %2106 = vmatpush.msra.mxu0 0.0
    %2107 = vmatpush.msra.mxu0 0.0
    %2108 = vmatpush.msra.mxu0 0.0
    %2109 = vmatpush.msra.mxu0 0.0
    %2110 = vmatpush.msra.mxu0 0.0
    %2111 = vmatpush.msra.mxu0 0.0
    %2112 = vmatpush.msra.mxu0 0.0
    %2113 = vmatpush.msra.mxu0 0.0
    %2114 = vmatpush.msra.mxu0 0.0
    %2115 = vmatpush.msra.mxu0 0.0
    %2116 = vmatpush.msra.mxu0 %v2093
    %2117 = vmatpush.msra.mxu0 %v2092
    %2118 = vmatmul.f32.gmra.mxu0 %v2100
    %v2119 = vpop.f32.mrf.mxu0
    %v2120 = vadd.f32 %v2096, %v2119
    %2121 = vdwg.mxu0
    %v2122 = vmax.f32 %v2120, 0.0
    %v2123 = vld [vmem:[#allocation13] sm:$0xff]
    %v2124 = vld [vmem:[#allocation13 + $0x8] sm:$0xff]
    %v2125 = vld [vmem:[#allocation13 + $0x10] sm:$0xff]
    %v2126 = vld [vmem:[#allocation13 + $0x18] sm:$0xff]
    %v2127 = vld [vmem:[#allocation13 + $0x20] sm:$0xff]
    %v2128 = vld [vmem:[#allocation13 + $0x28] sm:$0xff]
    %v2129 = vld [vmem:[#allocation13 + $0x30] sm:$0xff]
    %v2130 = vld [vmem:[#allocation13 + $0x38] sm:$0xff]
    %v2131 = vld [vmem:[#allocation15] sm:$0x1]
    %v2133 = vperm.slane %v2131, 0
    %vm2135 = vcmask 523264
    %v2137 = vsel %vm2135, %v2122, 0
    %2139 = vmatpush.msra.mxu0 0.0
    %2140 = vmatpush.msra.mxu0 0.0
    %2141 = vmatpush.msra.mxu0 0.0
    %2142 = vmatpush.msra.mxu0 0.0
    %2143 = vmatpush.msra.mxu0 0.0
    %2144 = vmatpush.msra.mxu0 0.0
    %2145 = vmatpush.msra.mxu0 0.0
    %2146 = vmatpush.msra.mxu0 0.0
    %2147 = vmatpush.msra.mxu0 %v2130
    %2148 = vmatpush.msra.mxu0 %v2129
    %2149 = vmatpush.msra.mxu0 %v2128
    %2150 = vmatpush.msra.mxu0 %v2127
    %2151 = vmatpush.msra.mxu0 %v2126
    %2152 = vmatpush.msra.mxu0 %v2125
    %2153 = vmatpush.msra.mxu0 %v2124
    %2154 = vmatpush.msra.mxu0 %v2123
    %2155 = vmatmul.f32.gmra.mxu0 %v2137
    %v2156 = vpop.f32.mrf.mxu0
    %v2157 = vadd.f32 %v2133, %v2156
    %2158 = vdwg.mxu0
    %2159 = vst [vmem:[%s11] sm:$0x3] %v2157
    // Predicated region
    $region82: #{representation_forward.1} parent=1 // pred_check
      _
    $region83: #{representation_forward.1} parent=1 // pred_check_branch
      %2161 = sbr.rel (0) target = $region85
    $region84: #{representation_forward.1} parent=1 // pred_region
      _
    $region85: #{representation_forward.1} parent=1 // pred_fallthru
      _
    // Predicated region
    $region86: #{representation_forward.1} parent=1 // pred_check
      _
    $region87: #{representation_forward.1} parent=1 // pred_check_branch
      %2163 = sbr.rel (0) target = $region89
    $region88: #{representation_forward.1} parent=1 // pred_region
      _
    $region89: #{representation_forward.1} parent=1 // pred_fallthru
      _
    %2164 = vsyncpa [#allocation3], 1
    %2165 = vsyncpa [#allocation5], 1
    %2166 = vsyncpa [#allocation8], 1
    %2167 = vsyncpa [#allocation11], 1
    %2168 = vsyncpa [#allocation14], 1

</llo_original>
